<compile_context>
chip_gen: v6e
topology: v6e:2x2x1
jax: 0.10.0
libtpu: 0.0.40
codegen_flags: <defaults>
</compile_context>

<pallas_src>
import numpy as np
import jax
import jax.numpy as jnp
from jax import lax
from jax.experimental import pallas as pl
from jax.experimental.pallas import tpu as pltpu

D_IN = 64        # small stand-in for the 768-dim PubMedBERT sentence embeddings
HIDDEN = 32      # small stand-in for hidden=200
LABELS_NUM = 2   # sc_fc output dim = labels_num - 1 = 1

_VMEM = pl.BlockSpec(memory_space=pltpu.MemorySpace.VMEM)


# ----------------------------------------------------------------------------
# Pallas kernel 1: fused bidirectional LSTM layer (both directions in one call).
#
# Layout:
#   x_ref   (T, Bp, 2*Din)  cols [0:Din] forward input, [Din:2Din] time-reversed
#                            (within doc length) input for the backward dir.
#   wxc_ref (2*Din, 8H)     gate-interleaved block weights: for gate g,
#                            cols [2gH:2gH+H] = fwd gate g, [2gH+H:2(g+1)H] = bwd.
#   whc_ref (2H, 8H)        rows [0:H] fwd Wh, rows [H:2H] bwd Wh (block diag).
#   bc_ref  (1, 8H)         combined bias (b_ih + b_hh), interleaved the same way.
#   out_ref (T, Bp, 2H)     cols [0:H] fwd h(t), cols [H:2H] bwd h (reversed time).
# PyTorch gate order (i, f, g, o).
# ----------------------------------------------------------------------------
def _bilstm_kernel(x_ref, wxc_ref, whc_ref, bc_ref, out_ref, gx_sc, h_sc, c_sc):
    T, Bp, Din2 = x_ref.shape
    G8 = wxc_ref.shape[1]      # 8H
    H2 = h_sc.shape[1]         # 2H  (fwd hidden | bwd hidden)

    # Hoisted input projection: one (T*Bp, 2*Din) @ (2*Din, 8H) MXU matmul + bias,
    # computed once before the serial recurrence (removes ~2/3 of per-step work).
    x_all = x_ref[...].reshape(T * Bp, Din2)
    gx = jnp.dot(x_all, wxc_ref[...], preferred_element_type=jnp.float32) + bc_ref[...]
    gx_sc[...] = gx.reshape(T, Bp, G8)

    h_sc[...] = jnp.zeros_like(h_sc)
    c_sc[...] = jnp.zeros_like(c_sc)

    def step(t, carry):
        gates = gx_sc[t] + jnp.dot(h_sc[...], whc_ref[...],
                                   preferred_element_type=jnp.float32)   # (Bp, 8H)
        # Full-width activations once, then aligned 2H-wide slices.
        sig = jax.nn.sigmoid(gates)
        th = jnp.tanh(gates)
        i = sig[:, 0 * H2:1 * H2]
        f = sig[:, 1 * H2:2 * H2]
        g = th[:, 2 * H2:3 * H2]
        o = sig[:, 3 * H2:4 * H2]
        c_new = f * c_sc[...] + i * g
        h_new = o * jnp.tanh(c_new)
        c_sc[...] = c_new
        h_sc[...] = h_new
        out_ref[t] = h_new
        return carry

    lax.fori_loop(0, T, step, 0)


def _bilstm_call(x_comb, wxc, whc, bc):
    T, Bp, _ = x_comb.shape
    H2 = whc.shape[0]          # 2H
    G8 = whc.shape[1]          # 8H
    return pl.pallas_call(
        _bilstm_kernel,
        out_shape=jax.ShapeDtypeStruct((T, Bp, H2), jnp.float32),
        in_specs=[_VMEM, _VMEM, _VMEM, _VMEM],
        out_specs=_VMEM,
        scratch_shapes=[pltpu.VMEM((T, Bp, G8), jnp.float32),   # precomputed x-gates
                        pltpu.VMEM((Bp, H2), jnp.float32),      # h state
                        pltpu.VMEM((Bp, H2), jnp.float32)],     # c state
    )(x_comb, wxc, whc, bc)


def _reverse_within_length(x, lengths):
    # x: (T, Bp, D).  Reverse each sequence only inside its valid length, so the
    # backward LSTM direction matches pack_padded_sequence semantics.
    T = x.shape[0]
    t_idx = jnp.arange(T)[:, None]
    lens = lengths[None, :]
    src = jnp.where(t_idx < lens, lens - 1 - t_idx, t_idx)  # (T, Bp)
    return jnp.take_along_axis(x, src[:, :, None], axis=0)


def bilstm_layer(x_tbd, lengths_pad, combined):
    # One fused kernel call per layer (fwd + bwd).
    # TODO(synk): the two layers could also be fused, but the within-length
    # reversal between layers would need per-row gathers inside the kernel.
    wxc, whc, bc = combined
    x_rev = _reverse_within_length(x_tbd, lengths_pad)
    x_comb = jnp.concatenate([x_tbd, x_rev], axis=-1)        # (T, Bp, 2*Din)
    out = _bilstm_call(x_comb, wxc, whc, bc)                 # (T, Bp, 2H)
    H = whc.shape[0] // 2
    h_f = out[..., :H]
    h_b = _reverse_within_length(out[..., H:], lengths_pad)  # un-reverse bwd dir
    return jnp.concatenate([h_f, h_b], axis=-1)              # (T, Bp, 2H)


# ----------------------------------------------------------------------------
# Pallas kernel 2: batched per-document attention + softmax aggregation + sc_fc.
# grid=(B,), lengths scalar-prefetched; score matrix masked in-kernel; the
# 1-wide sc_fc projection is fused as VPU row-dot reductions.
# TODO(synk): DynamicAttention is not defined in the source; modeled as scaled
# dot-product self-attention producing the local score matrix, matching the way
# the module consumes it (softmax(score) @ doc).
# Note: LearnedPositionEncoding is reproduced exactly as written in the module,
# i.e. weight[: x.size(0)] with x of batch-size 1 -> only the position-0
# embedding is added (broadcast to every sentence).
# ----------------------------------------------------------------------------
def _attn_fc_kernel(lens_ref, x_ref, pos_ref, wq_ref, wk_ref,
                    w1_ref, w2_ref, fcb_ref,
                    score_ref, att_ref, y_ref):
    b = pl.program_id(0)
    length = lens_ref[b]
    x = x_ref[0]                              # (T, 2H) raw LSTM outputs (doc)
    xp = x + pos_ref[...]                     # + position-0 embedding (broadcast)
    q = jnp.dot(xp, wq_ref[...], preferred_element_type=jnp.float32)
    k = jnp.dot(xp, wk_ref[...], preferred_element_type=jnp.float32)
    d = x.shape[1]
    scores = jnp.dot(q, k.T, preferred_element_type=jnp.float32) * (
        1.0 / jnp.sqrt(jnp.float32(d)))

    row = lax.broadcasted_iota(jnp.int32, scores.shape, 0)
    col = lax.broadcasted_iota(jnp.int32, scores.shape, 1)
    valid = (row < length) & (col < length)
    score_ref[0] = jnp.where(valid, scores, 0.0)            # masked in-kernel

    logits = jnp.where(col < length, scores, jnp.float32(-1e30))
    m = jnp.max(logits, axis=1, keepdims=True)
    e = jnp.exp(logits - m)
    p = e * pl.reciprocal(jnp.sum(e, axis=1, keepdims=True), approx=True)
    att = jnp.dot(p, x, preferred_element_type=jnp.float32)  # (T, 2H)
    att_ref[0] = att

    # Fused sc_fc: y = [x, att] @ fc_w + fc_b, as VPU reductions (output dim 1).
    y = (jnp.sum(x * w1_ref[...], axis=-1, keepdims=True)
         + jnp.sum(att * w2_ref[...], axis=-1, keepdims=True)
         + fcb_ref[...])
    y_ref[0] = y


def attention_fc_call(docs, lengths, pos0, wq, wk, w1, w2, fcb):
    B, T, d = docs.shape
    grid_spec = pltpu.PrefetchScalarGridSpec(
        num_scalar_prefetch=1,
        grid=(B,),
        in_specs=[
            pl.BlockSpec((1, T, d), lambda b, lens: (b, 0, 0)),   # per-doc features
            pl.BlockSpec((1, d), lambda b, lens: (0, 0)),         # pos0
            pl.BlockSpec((d, d), lambda b, lens: (0, 0)),         # wq
            pl.BlockSpec((d, d), lambda b, lens: (0, 0)),         # wk
            pl.BlockSpec((1, d), lambda b, lens: (0, 0)),         # fc w (lstm half)
            pl.BlockSpec((1, d), lambda b, lens: (0, 0)),         # fc w (att half)
            pl.BlockSpec((1, 1), lambda b, lens: (0, 0)),         # fc bias
        ],
        out_specs=(
            pl.BlockSpec((1, T, T), lambda b, lens: (b, 0, 0)),
            pl.BlockSpec((1, T, d), lambda b, lens: (b, 0, 0)),
            pl.BlockSpec((1, T, 1), lambda b, lens: (b, 0, 0)),
        ),
    )
    return pl.pallas_call(
        _attn_fc_kernel,
        out_shape=(jax.ShapeDtypeStruct((B, T, T), jnp.float32),
                   jax.ShapeDtypeStruct((B, T, d), jnp.float32),
                   jax.ShapeDtypeStruct((B, T, 1), jnp.float32)),
        grid_spec=grid_spec,
        compiler_params=pltpu.CompilerParams(
            dimension_semantics=("parallel",)),
    )(lengths, docs, pos0, wq, wk, w1, w2, fcb)


# ----------------------------------------------------------------------------
# Parameter init (deterministic, synthetic) + one-time weight preparation
# ----------------------------------------------------------------------------
def init_params(key):
    ks = jax.random.split(key, 17)

    def w(k, shape, scale=0.1):
        return scale * jax.random.normal(k, shape, dtype=jnp.float32)

    H = HIDDEN
    return {
        # LSTM layer 0 (input D_IN), forward / backward directions
        "l0_f": (w(ks[0], (D_IN, 4 * H)), w(ks[1], (H, 4 * H)), w(ks[2], (1, 4 * H))),
        "l0_b": (w(ks[3], (D_IN, 4 * H)), w(ks[4], (H, 4 * H)), w(ks[5], (1, 4 * H))),
        # LSTM layer 1 (input 2H), forward / backward directions
        "l1_f": (w(ks[6], (2 * H, 4 * H)), w(ks[7], (H, 4 * H)), w(ks[8], (1, 4 * H))),
        "l1_b": (w(ks[9], (2 * H, 4 * H)), w(ks[10], (H, 4 * H)), w(ks[11], (1, 4 * H))),
        # LearnedPositionEncoding: only row 0 is ever used (see kernel note)
        "pos0": w(ks[12], (1, 2 * H)),
        # attention projections (stand-in for DynamicAttention internals)
        "wq": w(ks[13], (2 * H, 2 * H)),
        "wk": w(ks[14], (2 * H, 2 * H)),
        # sc_fc : 4H -> labels_num - 1
        "fc_w": w(ks[15], (4 * H, LABELS_NUM - 1)),
        "fc_b": w(ks[16], (1, LABELS_NUM - 1)),
    }


def _combine_bidir_params(p_fwd, p_bwd):
    """Interleave fwd/bwd LSTM weights into the fused gate layout (host, once)."""
    wx_f, wh_f, b_f = (np.asarray(a) for a in p_fwd)
    wx_b, wh_b, b_b = (np.asarray(a) for a in p_bwd)
    D = wx_f.shape[0]
    H = wh_f.shape[0]
    wxc = np.zeros((2 * D, 8 * H), np.float32)
    whc = np.zeros((2 * H, 8 * H), np.float32)
    bc = np.zeros((1, 8 * H), np.float32)
    for g in range(4):
        cf = slice(2 * g * H, 2 * g * H + H)
        cb = slice(2 * g * H + H, 2 * (g + 1) * H)
        s = slice(g * H, (g + 1) * H)
        wxc[:D, cf] = wx_f[:, s]
        wxc[D:, cb] = wx_b[:, s]
        whc[:H, cf] = wh_f[:, s]
        whc[H:, cb] = wh_b[:, s]
        bc[:, cf] = b_f[:, s]
        bc[:, cb] = b_b[:, s]
    return jnp.asarray(wxc), jnp.asarray(whc), jnp.asarray(bc)


def prepare_params(params):
    H = HIDDEN
    fc_w = np.asarray(params["fc_w"])
    return {
        "l0_c": _combine_bidir_params(params["l0_f"], params["l0_b"]),
        "l1_c": _combine_bidir_params(params["l1_f"], params["l1_b"]),
        "pos0": params["pos0"],
        "wq": params["wq"],
        "wk": params["wk"],
        "fc_w1": jnp.asarray(fc_w[:2 * H].T),    # (1, 2H) -> lstm half of sc_fc
        "fc_w2": jnp.asarray(fc_w[2 * H:].T),    # (1, 2H) -> attention half
        "fc_b": params["fc_b"],                  # (1, 1)
    }


# ----------------------------------------------------------------------------
# Target construction (glue, mirrors att_target in the module)
# ----------------------------------------------------------------------------
def att_targets_np(targets_att, doc_sizes, t_pad):
    per_doc = []
    cur = 0
    for size in doc_sizes:
        doc = targets_att[cur:cur + size]
        cur += size
        x = np.zeros((size, size), dtype=np.float32)
        left = 0
        right = 0
        while right < size:
            if doc[right] == 1:
                x[left:right + 1, left:right + 1] = 1.0
                left = right + 1
            right += 1
        per_doc.append(x)
    padded = np.zeros((len(doc_sizes), t_pad, t_pad), dtype=np.float32)
    for b, x in enumerate(per_doc):
        padded[b, :x.shape[0], :x.shape[1]] = x
    return per_doc, padded


# ----------------------------------------------------------------------------
# Jitted device-side core: LSTM stack + batched attention/fc + masked BCE loss
# ----------------------------------------------------------------------------
@jax.jit
def _device_core(prepared, x_tbd, lengths, lengths_pad, att_targets_pad):
    h1 = bilstm_layer(x_tbd, lengths_pad, prepared["l0_c"])   # (T, Bp, 2H)
    h2 = bilstm_layer(h1, lengths_pad, prepared["l1_c"])      # (T, Bp, 2H)

    B = lengths.shape[0]
    docs = jnp.transpose(h2, (1, 0, 2))[:B]                   # (B, T, 2H)

    scores, att, y_pad = attention_fc_call(
        docs, lengths, prepared["pos0"], prepared["wq"], prepared["wk"],
        prepared["fc_w1"], prepared["fc_w2"], prepared["fc_b"])

    # attention supervision loss: per-doc mean BCE-with-logits over [:size,:size],
    # then mean over docs (matches nn.BCEWithLogitsLoss(reduction='mean')).
    T = scores.shape[1]
    row = jnp.arange(T)[None, :, None]
    col = jnp.arange(T)[None, None, :]
    valid = (row < lengths[:, None, None]) & (col < lengths[:, None, None])
    bce = (jnp.maximum(scores, 0.0) - scores * att_targets_pad
           + jnp.log1p(jnp.exp(-jnp.abs(scores))))
    lens_f = lengths.astype(jnp.float32)
    per_doc = jnp.sum(jnp.where(valid, bce, 0.0), axis=(1, 2)) / (lens_f * lens_f)
    sc_att_loss = jnp.mean(per_doc)
    return scores, att, y_pad, sc_att_loss


# ----------------------------------------------------------------------------
# Model forward (host-side bookkeeping + jitted device core)
# ----------------------------------------------------------------------------
def model_forward(prepared, sent_enc, doc_sizes, targets_att, targets_labels):
    B = len(doc_sizes)
    N = int(sum(doc_sizes))
    max_doc = int(max(doc_sizes))
    T_pad = ((max_doc + 7) // 8) * 8        # sublane-friendly padding
    Bp = ((B + 7) // 8) * 8                 # pad batch to 8 sublanes

    # pack documents into time-major padded tensor (T_pad, Bp, D_IN)
    sent_np = np.asarray(sent_enc)
    x_np = np.zeros((T_pad, Bp, D_IN), dtype=np.float32)
    cur = 0
    for b, size in enumerate(doc_sizes):
        x_np[:size, b, :] = sent_np[cur:cur + size]
        cur += size
    x_tbd = jnp.asarray(x_np)
    lengths = jnp.asarray(np.asarray(doc_sizes, dtype=np.int32))       # (B,)
    lp = np.ones((Bp,), dtype=np.int32)
    lp[:B] = doc_sizes
    lengths_pad = jnp.asarray(lp)                                      # (Bp,)

    att_t_list, att_t_pad = att_targets_np(np.asarray(targets_att), doc_sizes, T_pad)

    scores, att, y_pad, sc_att_loss = _device_core(
        prepared, x_tbd, lengths, lengths_pad, jnp.asarray(att_t_pad))

    docs_score_local = [scores[b, :s, :s] for b, s in enumerate(doc_sizes)]
    y = jnp.concatenate([y_pad[b, :s, :] for b, s in enumerate(doc_sizes)], axis=0)

    # TODO(synk): MatrixLoss is not defined in the source module; span loss skipped.
    loss_span = jnp.float32(0.0)

    # CRF with labels_num - 1 = 1 tag: log-likelihood numerator equals the
    # partition function, so loss_sc = 0 and decode is the single tag 0 (+1).
    loss_sc = jnp.float32(0.0)
    output_seg = [0 + 1 for _ in range(N)]

    att_t = [jnp.asarray(t) for t in att_t_list]
    return (output_seg,
            (loss_sc, 0.2 * (loss_span + sc_att_loss)),
            output_seg,
            docs_score_local,
            att_t,
            y)


# ----------------------------------------------------------------------------
if __name__ == "__main__":
    key = jax.random.PRNGKey(0)
    k_param, k_enc = jax.random.split(key)

    prepared = prepare_params(init_params(k_param))

    # synthetic "BERT" sentence encodings: 2 documents with 5 and 3 sentences
    doc_sizes = [5, 3]
    N_total = sum(doc_sizes)
    sent_enc = jax.random.normal(k_enc, (N_total, D_IN), dtype=jnp.float32)

    # targets[0]: segment-boundary indicators; targets[1]: labels in {1, 2}
    targets_att = np.array([0, 0, 1, 0, 1, 0, 1, 1], dtype=np.int32)
    targets_labels = np.array([1, 1, 2, 1, 2, 1, 2, 2], dtype=np.int32)

    out = model_forward(prepared, sent_enc, doc_sizes, targets_att, targets_labels)
    output_seg, (loss_sc, aux_loss), _, docs_score_local, att_t, y = out

    jax.block_until_ready(aux_loss)
    jax.block_until_ready(y)
    for s in docs_score_local:
        jax.block_until_ready(s)

    assert y.shape == (N_total, LABELS_NUM - 1)
    assert len(output_seg) == N_total
    print("KERNEL_OK")
</pallas_src>

<mosaic_0001>
module attributes {stable_mosaic.version = 11 : i64} {
  func.func @_bilstm_kernel(%arg0: memref<8x8x128xf32, #tpu.memory_space<vmem>>, %arg1: memref<128x256xf32, #tpu.memory_space<vmem>>, %arg2: memref<64x256xf32, #tpu.memory_space<vmem>>, %arg3: memref<1x256xf32, #tpu.memory_space<vmem>>, %arg4: memref<8x8x64xf32, #tpu.memory_space<vmem>>, %arg5: memref<8x8x256xf32, #tpu.memory_space<vmem>>, %arg6: memref<8x64xf32, #tpu.memory_space<vmem>>, %arg7: memref<8x64xf32, #tpu.memory_space<vmem>>) attributes {dimension_semantics = [], scalar_prefetch = 0 : i64, scratch_operands = 3 : i64, tpu.core_type = #tpu.core_type<tc>} {
    %c0 = arith.constant 0 : index
    %c0_0 = arith.constant 0 : index
    %c0_1 = arith.constant 0 : index
    %0 = vector.load %arg0[%c0, %c0_0, %c0_1] : memref<8x8x128xf32, #tpu.memory_space<vmem>>, vector<8x8x128xf32>
    %1 = vector.shape_cast %0 : vector<8x8x128xf32> to vector<64x128xf32>
    %c0_2 = arith.constant 0 : index
    %c0_3 = arith.constant 0 : index
    %2 = vector.load %arg1[%c0_2, %c0_3] : memref<128x256xf32, #tpu.memory_space<vmem>>, vector<128x256xf32>
    %cst = arith.constant dense<0.000000e+00> : vector<64x256xf32>
    %3 = tpu.matmul %1, %2, %cst {dimension_numbers = #tpu.dot_dimension_numbers<[1], [0], [0], [1], [0, 0, 1, 1], [], []>} : vector<64x128xf32>, vector<128x256xf32>, vector<64x256xf32> -> vector<64x256xf32>
    %c0_4 = arith.constant 0 : index
    %c0_5 = arith.constant 0 : index
    %4 = vector.load %arg3[%c0_4, %c0_5] : memref<1x256xf32, #tpu.memory_space<vmem>>, vector<1x256xf32>
    %5 = vector.broadcast %4 : vector<1x256xf32> to vector<64x256xf32>
    %6 = arith.addf %3, %5 : vector<64x256xf32>
    %7 = vector.shape_cast %6 : vector<64x256xf32> to vector<8x8x256xf32>
    %c0_6 = arith.constant 0 : index
    %c0_7 = arith.constant 0 : index
    %c0_8 = arith.constant 0 : index
    %8 = vector.load %arg5[%c0_6, %c0_7, %c0_8] : memref<8x8x256xf32, #tpu.memory_space<vmem>>, vector<8x8x256xf32>
    tpu.vector_store %arg5[%c0_6, %c0_7, %c0_8], %7 {strides = array<i32>} : memref<8x8x256xf32, #tpu.memory_space<vmem>>, vector<8x8x256xf32>,
    %cst_9 = arith.constant 0.000000e+00 : f32
    %9 = vector.broadcast %cst_9 : f32 to vector<8x64xf32>
    %c0_10 = arith.constant 0 : index
    %c0_11 = arith.constant 0 : index
    %10 = vector.load %arg6[%c0_10, %c0_11] : memref<8x64xf32, #tpu.memory_space<vmem>>, vector<8x64xf32>
    tpu.vector_store %arg6[%c0_10, %c0_11], %9 {strides = array<i32>} : memref<8x64xf32, #tpu.memory_space<vmem>>, vector<8x64xf32>,
    %cst_12 = arith.constant 0.000000e+00 : f32
    %11 = vector.broadcast %cst_12 : f32 to vector<8x64xf32>
    %c0_13 = arith.constant 0 : index
    %c0_14 = arith.constant 0 : index
    %12 = vector.load %arg7[%c0_13, %c0_14] : memref<8x64xf32, #tpu.memory_space<vmem>>, vector<8x64xf32>
    tpu.vector_store %arg7[%c0_13, %c0_14], %11 {strides = array<i32>} : memref<8x64xf32, #tpu.memory_space<vmem>>, vector<8x64xf32>,
    %c0_i32 = arith.constant 0 : i32
    %c8_i32 = arith.constant 8 : i32
    %13 = arith.addi %c0_i32, %c8_i32 : i32
    %c1_i32 = arith.constant 1 : i32
    scf.for %arg8 = %c0_i32 to %13 step %c1_i32  : i32 {
      %14 = arith.index_cast %arg8 : i32 to index
      %c0_16 = arith.constant 0 : index
      %c0_17 = arith.constant 0 : index
      %15 = vector.load %arg5[%14, %c0_16, %c0_17] : memref<8x8x256xf32, #tpu.memory_space<vmem>>, vector<1x8x256xf32>
      %16 = vector.shape_cast %15 : vector<1x8x256xf32> to vector<8x256xf32>
      %c0_18 = arith.constant 0 : index
      %c0_19 = arith.constant 0 : index
      %17 = vector.load %arg6[%c0_18, %c0_19] : memref<8x64xf32, #tpu.memory_space<vmem>>, vector<8x64xf32>
      %c0_20 = arith.constant 0 : index
      %c0_21 = arith.constant 0 : index
      %18 = vector.load %arg2[%c0_20, %c0_21] : memref<64x256xf32, #tpu.memory_space<vmem>>, vector<64x256xf32>
      %cst_22 = arith.constant dense<0.000000e+00> : vector<8x256xf32>
      %19 = tpu.matmul %17, %18, %cst_22 {dimension_numbers = #tpu.dot_dimension_numbers<[1], [0], [0], [1], [0, 0, 1, 1], [], []>} : vector<8x64xf32>, vector<64x256xf32>, vector<8x256xf32> -> vector<8x256xf32>
      %20 = arith.addf %16, %19 : vector<8x256xf32>
      %21 = arith.negf %20 : vector<8x256xf32>
      %22 = math.exp %21 : vector<8x256xf32>
      %cst_23 = arith.constant 1.000000e+00 : f32
      %23 = vector.broadcast %cst_23 : f32 to vector<8x256xf32>
      %24 = arith.addf %23, %22 : vector<8x256xf32>
      %25 = arith.divf %23, %24 : vector<8x256xf32>
      %26 = math.tanh %20 : vector<8x256xf32>
      %27 = vector.extract_strided_slice %25 {offsets = [0, 0], sizes = [8, 64], strides = [1, 1]} : vector<8x256xf32> to vector<8x64xf32>
      %28 = vector.extract_strided_slice %25 {offsets = [0, 64], sizes = [8, 64], strides = [1, 1]} : vector<8x256xf32> to vector<8x64xf32>
      %29 = vector.extract_strided_slice %26 {offsets = [0, 128], sizes = [8, 64], strides = [1, 1]} : vector<8x256xf32> to vector<8x64xf32>
      %30 = vector.extract_strided_slice %25 {offsets = [0, 192], sizes = [8, 64], strides = [1, 1]} : vector<8x256xf32> to vector<8x64xf32>
      %c0_24 = arith.constant 0 : index
      %c0_25 = arith.constant 0 : index
      %31 = vector.load %arg7[%c0_24, %c0_25] : memref<8x64xf32, #tpu.memory_space<vmem>>, vector<8x64xf32>
      %32 = arith.mulf %28, %31 : vector<8x64xf32>
      %33 = arith.mulf %27, %29 : vector<8x64xf32>
      %34 = arith.addf %32, %33 : vector<8x64xf32>
      %35 = math.tanh %34 : vector<8x64xf32>
      %36 = arith.mulf %30, %35 : vector<8x64xf32>
      %c0_26 = arith.constant 0 : index
      %c0_27 = arith.constant 0 : index
      %37 = vector.load %arg7[%c0_26, %c0_27] : memref<8x64xf32, #tpu.memory_space<vmem>>, vector<8x64xf32>
      tpu.vector_store %arg7[%c0_26, %c0_27], %34 {strides = array<i32>} : memref<8x64xf32, #tpu.memory_space<vmem>>, vector<8x64xf32>,
      %c0_28 = arith.constant 0 : index
      %c0_29 = arith.constant 0 : index
      %38 = vector.load %arg6[%c0_28, %c0_29] : memref<8x64xf32, #tpu.memory_space<vmem>>, vector<8x64xf32>
      tpu.vector_store %arg6[%c0_28, %c0_29], %36 {strides = array<i32>} : memref<8x64xf32, #tpu.memory_space<vmem>>, vector<8x64xf32>,
      %39 = arith.index_cast %arg8 : i32 to index
      %c0_30 = arith.constant 0 : index
      %c0_31 = arith.constant 0 : index
      %40 = vector.load %arg4[%39, %c0_30, %c0_31] : memref<8x8x64xf32, #tpu.memory_space<vmem>>, vector<1x8x64xf32>
      %41 = vector.shape_cast %40 : vector<1x8x64xf32> to vector<8x64xf32>
      %42 = vector.shape_cast %36 : vector<8x64xf32> to vector<1x8x64xf32>
      tpu.vector_store %arg4[%39, %c0_30, %c0_31], %42 {strides = array<i32>} : memref<8x8x64xf32, #tpu.memory_space<vmem>>, vector<1x8x64xf32>,
    }
    %c8_i32_15 = arith.constant 8 : i32
    return
  }
}

module attributes {stable_mosaic.version = 11 : i64} {
  func.func @_attn_fc_kernel(%arg0: i32, %arg1: memref<2xi32, #tpu.memory_space<smem>>, %arg2: memref<1x8x64xf32, #tpu.memory_space<vmem>>, %arg3: memref<1x64xf32, #tpu.memory_space<vmem>>, %arg4: memref<64x64xf32, #tpu.memory_space<vmem>>, %arg5: memref<64x64xf32, #tpu.memory_space<vmem>>, %arg6: memref<1x64xf32, #tpu.memory_space<vmem>>, %arg7: memref<1x64xf32, #tpu.memory_space<vmem>>, %arg8: memref<1x1xf32, #tpu.memory_space<vmem>>, %arg9: memref<1x8x8xf32, #tpu.memory_space<vmem>>, %arg10: memref<1x8x64xf32, #tpu.memory_space<vmem>>, %arg11: memref<1x8x1xf32, #tpu.memory_space<vmem>>) attributes {dimension_semantics = [#tpu.dimension_semantics<parallel>], iteration_bounds = array<i64: 2>, scalar_prefetch = 1 : i64, scratch_operands = 0 : i64, tpu.core_type = #tpu.core_type<tc>, window_params = [{transform_indices = @transform_0, window_bounds = array<i64: 1, 8, 64>}, {pipeline_mode = #tpu.pipeline_mode<synchronous>, transform_indices = @transform_1, window_bounds = array<i64: 1, 64>}, {pipeline_mode = #tpu.pipeline_mode<synchronous>, transform_indices = @transform_2, window_bounds = array<i64: 64, 64>}, {pipeline_mode = #tpu.pipeline_mode<synchronous>, transform_indices = @transform_3, window_bounds = array<i64: 64, 64>}, {pipeline_mode = #tpu.pipeline_mode<synchronous>, transform_indices = @transform_4, window_bounds = array<i64: 1, 64>}, {pipeline_mode = #tpu.pipeline_mode<synchronous>, transform_indices = @transform_5, window_bounds = array<i64: 1, 64>}, {pipeline_mode = #tpu.pipeline_mode<synchronous>, transform_indices = @transform_6, window_bounds = array<i64: 1, 1>}, {transform_indices = @transform_7, window_bounds = array<i64: 1, 8, 8>}, {transform_indices = @transform_8, window_bounds = array<i64: 1, 8, 64>}, {transform_indices = @transform_9, window_bounds = array<i64: 1, 8, 1>}]} {
    %0 = arith.index_cast %arg0 : i32 to index
    %1 = memref.load %arg1[%0] : memref<2xi32, #tpu.memory_space<smem>>
    %c0 = arith.constant 0 : index
    %c0_0 = arith.constant 0 : index
    %c0_1 = arith.constant 0 : index
    %2 = vector.load %arg2[%c0, %c0_0, %c0_1] : memref<1x8x64xf32, #tpu.memory_space<vmem>>, vector<1x8x64xf32>
    %3 = vector.shape_cast %2 : vector<1x8x64xf32> to vector<8x64xf32>
    %c0_2 = arith.constant 0 : index
    %c0_3 = arith.constant 0 : index
    %4 = vector.load %arg3[%c0_2, %c0_3] : memref<1x64xf32, #tpu.memory_space<vmem>>, vector<1x64xf32>
    %5 = vector.broadcast %4 : vector<1x64xf32> to vector<8x64xf32>
    %6 = arith.addf %3, %5 : vector<8x64xf32>
    %c0_4 = arith.constant 0 : index
    %c0_5 = arith.constant 0 : index
    %7 = vector.load %arg4[%c0_4, %c0_5] : memref<64x64xf32, #tpu.memory_space<vmem>>, vector<64x64xf32>
    %cst = arith.constant dense<0.000000e+00> : vector<8x64xf32>
    %8 = tpu.matmul %6, %7, %cst {dimension_numbers = #tpu.dot_dimension_numbers<[1], [0], [0], [1], [0, 0, 1, 1], [], []>} : vector<8x64xf32>, vector<64x64xf32>, vector<8x64xf32> -> vector<8x64xf32>
    %c0_6 = arith.constant 0 : index
    %c0_7 = arith.constant 0 : index
    %9 = vector.load %arg5[%c0_6, %c0_7] : memref<64x64xf32, #tpu.memory_space<vmem>>, vector<64x64xf32>
    %cst_8 = arith.constant dense<0.000000e+00> : vector<8x64xf32>
    %10 = tpu.matmul %6, %9, %cst_8 {dimension_numbers = #tpu.dot_dimension_numbers<[1], [0], [0], [1], [0, 0, 1, 1], [], []>} : vector<8x64xf32>, vector<64x64xf32>, vector<8x64xf32> -> vector<8x64xf32>
    %11 = tpu.transpose %10, [1, 0] : vector<8x64xf32> -> vector<64x8xf32>
    %cst_9 = arith.constant dense<0.000000e+00> : vector<8x8xf32>
    %12 = tpu.matmul %8, %11, %cst_9 {dimension_numbers = #tpu.dot_dimension_numbers<[1], [0], [0], [1], [0, 0, 1, 1], [], []>} : vector<8x64xf32>, vector<64x8xf32>, vector<8x8xf32> -> vector<8x8xf32>
    %cst_10 = arith.constant 6.400000e+01 : f32
    %13 = math.sqrt %cst_10 : f32
    %cst_11 = arith.constant 1.000000e+00 : f32
    %14 = arith.divf %cst_11, %13 : f32
    %15 = vector.broadcast %14 : f32 to vector<8x8xf32>
    %16 = arith.mulf %12, %15 : vector<8x8xf32>
    %17 = tpu.iota {dimensions = array<i32: 0>} : vector<8x8xi32>
    %18 = tpu.iota {dimensions = array<i32: 1>} : vector<8x8xi32>
    %19 = vector.broadcast %1 : i32 to vector<8x8xi32>
    %20 = arith.cmpi slt, %17, %19 : vector<8x8xi32>
    %21 = vector.broadcast %1 : i32 to vector<8x8xi32>
    %22 = arith.cmpi slt, %18, %21 : vector<8x8xi32>
    %23 = arith.andi %20, %22 : vector<8x8xi1>
    %cst_12 = arith.constant 0.000000e+00 : f32
    %24 = vector.broadcast %cst_12 : f32 to vector<8x8xf32>
    %25 = arith.select %23, %16, %24 : vector<8x8xi1>, vector<8x8xf32>
    %c0_13 = arith.constant 0 : index
    %c0_14 = arith.constant 0 : index
    %c0_15 = arith.constant 0 : index
    %26 = vector.load %arg9[%c0_13, %c0_14, %c0_15] : memref<1x8x8xf32, #tpu.memory_space<vmem>>, vector<1x8x8xf32>
    %27 = vector.shape_cast %26 : vector<1x8x8xf32> to vector<8x8xf32>
    %28 = vector.shape_cast %25 : vector<8x8xf32> to vector<1x8x8xf32>
    tpu.vector_store %arg9[%c0_13, %c0_14, %c0_15], %28 {strides = array<i32>} : memref<1x8x8xf32, #tpu.memory_space<vmem>>, vector<1x8x8xf32>,
    %29 = vector.broadcast %1 : i32 to vector<8x8xi32>
    %30 = arith.cmpi slt, %18, %29 : vector<8x8xi32>
    %cst_16 = arith.constant -1.000000e+30 : f32
    %31 = vector.broadcast %cst_16 : f32 to vector<8x8xf32>
    %32 = arith.select %30, %16, %31 : vector<8x8xi1>, vector<8x8xf32>
    %cst_17 = arith.constant dense<0xFF800000> : vector<8xf32>
    %33 = vector.multi_reduction <maximumf>, %32, %cst_17 [1] : vector<8x8xf32> to vector<8xf32>
    %34 = vector.shape_cast %33 : vector<8xf32> to vector<8x1xf32>
    %35 = vector.broadcast %34 : vector<8x1xf32> to vector<8x8xf32>
    %36 = arith.subf %32, %35 : vector<8x8xf32>
    %37 = math.exp %36 : vector<8x8xf32>
    %cst_18 = arith.constant dense<0.000000e+00> : vector<8xf32>
    %38 = vector.multi_reduction <add>, %37, %cst_18 [1] : vector<8x8xf32> to vector<8xf32>
    %39 = vector.shape_cast %38 : vector<8xf32> to vector<8x1xf32>
    %40 = tpu.reciprocal %39 {approx = true} : vector<8x1xf32> -> vector<8x1xf32>
    %41 = vector.broadcast %40 : vector<8x1xf32> to vector<8x8xf32>
    %42 = arith.mulf %37, %41 : vector<8x8xf32>
    %cst_19 = arith.constant dense<0.000000e+00> : vector<8x64xf32>
    %43 = tpu.matmul %42, %3, %cst_19 {dimension_numbers = #tpu.dot_dimension_numbers<[1], [0], [0], [1], [0, 0, 1, 1], [], []>} : vector<8x8xf32>, vector<8x64xf32>, vector<8x64xf32> -> vector<8x64xf32>
    %c0_20 = arith.constant 0 : index
    %c0_21 = arith.constant 0 : index
    %c0_22 = arith.constant 0 : index
    %44 = vector.load %arg10[%c0_20, %c0_21, %c0_22] : memref<1x8x64xf32, #tpu.memory_space<vmem>>, vector<1x8x64xf32>
    %45 = vector.shape_cast %44 : vector<1x8x64xf32> to vector<8x64xf32>
    %46 = vector.shape_cast %43 : vector<8x64xf32> to vector<1x8x64xf32>
    tpu.vector_store %arg10[%c0_20, %c0_21, %c0_22], %46 {strides = array<i32>} : memref<1x8x64xf32, #tpu.memory_space<vmem>>, vector<1x8x64xf32>,
    %c0_23 = arith.constant 0 : index
    %c0_24 = arith.constant 0 : index
    %47 = vector.load %arg6[%c0_23, %c0_24] : memref<1x64xf32, #tpu.memory_space<vmem>>, vector<1x64xf32>
    %48 = vector.broadcast %47 : vector<1x64xf32> to vector<8x64xf32>
    %49 = arith.mulf %3, %48 : vector<8x64xf32>
    %cst_25 = arith.constant dense<0.000000e+00> : vector<8xf32>
    %50 = vector.multi_reduction <add>, %49, %cst_25 [1] : vector<8x64xf32> to vector<8xf32>
    %51 = vector.shape_cast %50 : vector<8xf32> to vector<8x1xf32>
    %c0_26 = arith.constant 0 : index
    %c0_27 = arith.constant 0 : index
    %52 = vector.load %arg7[%c0_26, %c0_27] : memref<1x64xf32, #tpu.memory_space<vmem>>, vector<1x64xf32>
    %53 = vector.broadcast %52 : vector<1x64xf32> to vector<8x64xf32>
    %54 = arith.mulf %43, %53 : vector<8x64xf32>
    %cst_28 = arith.constant dense<0.000000e+00> : vector<8xf32>
    %55 = vector.multi_reduction <add>, %54, %cst_28 [1] : vector<8x64xf32> to vector<8xf32>
    %56 = vector.shape_cast %55 : vector<8xf32> to vector<8x1xf32>
    %57 = arith.addf %51, %56 : vector<8x1xf32>
    %c0_29 = arith.constant 0 : index
    %c0_30 = arith.constant 0 : index
    %58 = vector.load %arg8[%c0_29, %c0_30] : memref<1x1xf32, #tpu.memory_space<vmem>>, vector<1x1xf32>
    %59 = vector.broadcast %58 : vector<1x1xf32> to vector<8x1xf32>
    %60 = arith.addf %57, %59 : vector<8x1xf32>
    %c0_31 = arith.constant 0 : index
    %c0_32 = arith.constant 0 : index
    %c0_33 = arith.constant 0 : index
    %61 = vector.load %arg11[%c0_31, %c0_32, %c0_33] : memref<1x8x1xf32, #tpu.memory_space<vmem>>, vector<1x8x1xf32>
    %62 = vector.shape_cast %61 : vector<1x8x1xf32> to vector<8x1xf32>
    %63 = vector.shape_cast %60 : vector<8x1xf32> to vector<1x8x1xf32>
    tpu.vector_store %arg11[%c0_31, %c0_32, %c0_33], %63 {strides = array<i32>} : memref<1x8x1xf32, #tpu.memory_space<vmem>>, vector<1x8x1xf32>,
    return
  }
  func.func @transform_0(%arg0: i32, %arg1: memref<2xi32, #tpu.memory_space<smem>>) -> (i32, i32, i32) {
    %c0_i32 = arith.constant 0 : i32
    %c0_i32_0 = arith.constant 0 : i32
    %c0_i32_1 = arith.constant 0 : i32
    return %arg0, %c0_i32, %c0_i32_0 : i32, i32, i32
  }
  func.func @transform_1(%arg0: i32, %arg1: memref<2xi32, #tpu.memory_space<smem>>) -> (i32, i32) {
    %c0_i32 = arith.constant 0 : i32
    %c0_i32_0 = arith.constant 0 : i32
    %c0_i32_1 = arith.constant 0 : i32
    return %c0_i32, %c0_i32_0 : i32, i32
  }
  func.func @transform_2(%arg0: i32, %arg1: memref<2xi32, #tpu.memory_space<smem>>) -> (i32, i32) {
    %c0_i32 = arith.constant 0 : i32
    %c0_i32_0 = arith.constant 0 : i32
    %c0_i32_1 = arith.constant 0 : i32
    return %c0_i32, %c0_i32_0 : i32, i32
  }
  func.func @transform_3(%arg0: i32, %arg1: memref<2xi32, #tpu.memory_space<smem>>) -> (i32, i32) {
    %c0_i32 = arith.constant 0 : i32
    %c0_i32_0 = arith.constant 0 : i32
    %c0_i32_1 = arith.constant 0 : i32
    return %c0_i32, %c0_i32_0 : i32, i32
  }
  func.func @transform_4(%arg0: i32, %arg1: memref<2xi32, #tpu.memory_space<smem>>) -> (i32, i32) {
    %c0_i32 = arith.constant 0 : i32
    %c0_i32_0 = arith.constant 0 : i32
    %c0_i32_1 = arith.constant 0 : i32
    return %c0_i32, %c0_i32_0 : i32, i32
  }
  func.func @transform_5(%arg0: i32, %arg1: memref<2xi32, #tpu.memory_space<smem>>) -> (i32, i32) {
    %c0_i32 = arith.constant 0 : i32
    %c0_i32_0 = arith.constant 0 : i32
    %c0_i32_1 = arith.constant 0 : i32
    return %c0_i32, %c0_i32_0 : i32, i32
  }
  func.func @transform_6(%arg0: i32, %arg1: memref<2xi32, #tpu.memory_space<smem>>) -> (i32, i32) {
    %c0_i32 = arith.constant 0 : i32
    %c0_i32_0 = arith.constant 0 : i32
    %c0_i32_1 = arith.constant 0 : i32
    return %c0_i32, %c0_i32_0 : i32, i32
  }
  func.func @transform_7(%arg0: i32, %arg1: memref<2xi32, #tpu.memory_space<smem>>) -> (i32, i32, i32) {
    %c0_i32 = arith.constant 0 : i32
    %c0_i32_0 = arith.constant 0 : i32
    %c0_i32_1 = arith.constant 0 : i32
    return %arg0, %c0_i32, %c0_i32_0 : i32, i32, i32
  }
  func.func @transform_8(%arg0: i32, %arg1: memref<2xi32, #tpu.memory_space<smem>>) -> (i32, i32, i32) {
    %c0_i32 = arith.constant 0 : i32
    %c0_i32_0 = arith.constant 0 : i32
    %c0_i32_1 = arith.constant 0 : i32
    return %arg0, %c0_i32, %c0_i32_0 : i32, i32, i32
  }
  func.func @transform_9(%arg0: i32, %arg1: memref<2xi32, #tpu.memory_space<smem>>) -> (i32, i32, i32) {
    %c0_i32 = arith.constant 0 : i32
    %c0_i32_0 = arith.constant 0 : i32
    %c0_i32_1 = arith.constant 0 : i32
    return %arg0, %c0_i32, %c0_i32_0 : i32, i32, i32
  }
}

</mosaic_0001>

<llo_original>
// kernel: _device_core.3
$region0: #{_device_core.3}
  #allocation0 [shape = 'u32[]', space=smem, size = 0x4, offset = 0x4, fixed_abs, tag = 'smem constant byte address 0x4 - core index']
  #allocation1 [shape = 'u32[144,128]{1,0:T(1,128)}', space=vmem, size = 0x12000, scoped, tag = 'internal scratch']
  #allocation2 [shape = 'f32[8,8,256]{2,1,0:T(8,128)}', space=vmem, size = 0x10000, scoped, tag = 'scratch operand']
  #allocation3 [shape = 'f32[8,64]{1,0:T(8,128)}', space=vmem, size = 0x1000, scoped, tag = 'scratch operand']
  #allocation4 [shape = 'f32[8,64]{1,0:T(8,128)}', space=vmem, size = 0x1000, scoped, tag = 'scratch operand']
  %s0 = inlined_call_operand.vmem [shape: f32[8,8,128], index: 0, kind: input, shape index: {}]
  %s1 = inlined_call_operand.vmem [shape: f32[128,256], index: 1, kind: input, shape index: {}]
  %s2 = inlined_call_operand.vmem [shape: f32[64,256], index: 2, kind: input, shape index: {}]
  %s3 = inlined_call_operand.vmem [shape: f32[1,256], index: 3, kind: input, shape index: {}]
  %s4 = inlined_call_operand.vmem [shape: f32[8,8,64], index: 4, kind: output, shape index: {}]
  %s5 = sld [smem:[#allocation0]]
  $region33: #{_device_core.3} parent=0
    _
  %s7 = ssub.s32 1, %s5
  %s8 = scalar_select 0, %s7, %s5
  // Predicated region
  $region2: #{_device_core.3} parent=0 // pred_check
    _
  $region3: #{_device_core.3} parent=0 // pred_check_branch
    %10 = sbr.rel (0) target = $region5
  $region4: #{_device_core.3} parent=0 // pred_region
    _
  $region5: #{_device_core.3} parent=0 // pred_fallthru
    _
  // Predicated region
  $region6: #{_device_core.3} parent=0 // pred_check
    _
  $region7: #{_device_core.3} parent=0 // pred_check_branch
    %12 = sbr.rel (0) target = $region9
  $region8: #{_device_core.3} parent=0 // pred_region
    _
  $region9: #{_device_core.3} parent=0 // pred_fallthru
    _
  // Predicated region
  $region10: #{_device_core.3} parent=0 // pred_check
    _
  $region11: #{_device_core.3} parent=0 // pred_check_branch
    %14 = sbr.rel (0) target = $region13
  $region12: #{_device_core.3} parent=0 // pred_region
    _
  $region13: #{_device_core.3} parent=0 // pred_fallthru
    _
  // Predicated region
  $region14: #{_device_core.3} parent=0 // pred_check
    _
  $region15: #{_device_core.3} parent=0 // pred_check_branch
    %16 = sbr.rel (0) target = $region17
  $region16: #{_device_core.3} parent=0 // pred_region
    _
  $region17: #{_device_core.3} parent=0 // pred_fallthru
    _
  %v17 = vld [vmem:[%s0] sm:$0xff]
  %v18 = vld [vmem:[%s0 + $0x8] sm:$0xff]
  %v19 = vld [vmem:[%s0 + $0x10] sm:$0xff]
  %v20 = vld [vmem:[%s0 + $0x18] sm:$0xff]
  %v21 = vld [vmem:[%s0 + $0x20] sm:$0xff]
  %v22 = vld [vmem:[%s0 + $0x28] sm:$0xff]
  %v23 = vld [vmem:[%s0 + $0x30] sm:$0xff]
  %v24 = vld [vmem:[%s0 + $0x38] sm:$0xff]
  %v25 = vld [vmem:[%s1] sm:$0xff]
  %v26 = vld [vmem:[%s1 + $0x8] sm:$0xff]
  %v27 = vld [vmem:[%s1 + $0x10] sm:$0xff]
  %v28 = vld [vmem:[%s1 + $0x18] sm:$0xff]
  %v29 = vld [vmem:[%s1 + $0x20] sm:$0xff]
  %v30 = vld [vmem:[%s1 + $0x28] sm:$0xff]
  %v31 = vld [vmem:[%s1 + $0x30] sm:$0xff]
  %v32 = vld [vmem:[%s1 + $0x38] sm:$0xff]
  %v33 = vld [vmem:[%s1 + $0x40] sm:$0xff]
  %v34 = vld [vmem:[%s1 + $0x48] sm:$0xff]
  %v35 = vld [vmem:[%s1 + $0x50] sm:$0xff]
  %v36 = vld [vmem:[%s1 + $0x58] sm:$0xff]
  %v37 = vld [vmem:[%s1 + $0x60] sm:$0xff]
  %v38 = vld [vmem:[%s1 + $0x68] sm:$0xff]
  %v39 = vld [vmem:[%s1 + $0x70] sm:$0xff]
  %v40 = vld [vmem:[%s1 + $0x78] sm:$0xff]
  %v41 = vld [vmem:[%s1 + $0x80] sm:$0xff]
  %v42 = vld [vmem:[%s1 + $0x88] sm:$0xff]
  %v43 = vld [vmem:[%s1 + $0x90] sm:$0xff]
  %v44 = vld [vmem:[%s1 + $0x98] sm:$0xff]
  %v45 = vld [vmem:[%s1 + $0xa0] sm:$0xff]
  %v46 = vld [vmem:[%s1 + $0xa8] sm:$0xff]
  %v47 = vld [vmem:[%s1 + $0xb0] sm:$0xff]
  %v48 = vld [vmem:[%s1 + $0xb8] sm:$0xff]
  %v49 = vld [vmem:[%s1 + $0xc0] sm:$0xff]
  %v50 = vld [vmem:[%s1 + $0xc8] sm:$0xff]
  %v51 = vld [vmem:[%s1 + $0xd0] sm:$0xff]
  %v52 = vld [vmem:[%s1 + $0xd8] sm:$0xff]
  %v53 = vld [vmem:[%s1 + $0xe0] sm:$0xff]
  %v54 = vld [vmem:[%s1 + $0xe8] sm:$0xff]
  %v55 = vld [vmem:[%s1 + $0xf0] sm:$0xff]
  %v56 = vld [vmem:[%s1 + $0xf8] sm:$0xff]
  %v57 = vld [vmem:[%s3] sm:$0x3]
  %v59 = vlaneseq
  %v60 = vshrl.u32 %v59, 7
  %v61 = vsub.s32 0, %v60
  %v62 = vrot.slane %v57, %v61
  %v63 = vlaneseq
  %v64 = vshrl.u32 %v63, 7
  %v65 = vsub.s32 1, %v64
  %v66 = vrot.slane %v57, %v65
  %69 = vmatprep.subr.mxu0 %v56
  %70 = vmatpush1.msra.mxu0 %v55
  %71 = vmatprep.subr.mxu0 %v54
  %72 = vmatpush1.msra.mxu0 %v53
  %73 = vmatprep.subr.mxu0 %v52
  %74 = vmatpush1.msra.mxu0 %v51
  %75 = vmatprep.subr.mxu0 %v50
  %76 = vmatpush1.msra.mxu0 %v49
  %77 = vmatprep.subr.mxu0 %v48
  %78 = vmatpush1.msra.mxu0 %v47
  %79 = vmatprep.subr.mxu0 %v46
  %80 = vmatpush1.msra.mxu0 %v45
  %81 = vmatprep.subr.mxu0 %v44
  %82 = vmatpush1.msra.mxu0 %v43
  %83 = vmatprep.subr.mxu0 %v42
  %84 = vmatpush1.msra.mxu0 %v41
  %85 = vmatprep.subr.mxu0 %v40
  %86 = vmatpush1.msra.mxu0 %v39
  %87 = vmatprep.subr.mxu0 %v38
  %88 = vmatpush1.msra.mxu0 %v37
  %89 = vmatprep.subr.mxu0 %v36
  %90 = vmatpush1.msra.mxu0 %v35
  %91 = vmatprep.subr.mxu0 %v34
  %92 = vmatpush1.msra.mxu0 %v33
  %93 = vmatprep.subr.mxu0 %v32
  %94 = vmatpush1.msra.mxu0 %v31
  %95 = vmatprep.subr.mxu0 %v30
  %96 = vmatpush1.msra.mxu0 %v29
  %97 = vmatprep.subr.mxu0 %v28
  %98 = vmatpush1.msra.mxu0 %v27
  %99 = vmatprep.subr.mxu0 %v26
  %100 = vmatpush1.msra.mxu0 %v25
  %101 = vmatprep.subr.mxu0 0.0
  %102 = vmatpush2.msra.mxu0 0.0
  %103 = vmatprep.subr.mxu0 0.0
  %104 = vmatpush2.msra.mxu0 0.0
  %105 = vmatprep.subr.mxu0 0.0
  %106 = vmatpush2.msra.mxu0 0.0
  %107 = vmatprep.subr.mxu0 0.0
  %108 = vmatpush2.msra.mxu0 0.0
  %109 = vmatprep.subr.mxu0 0.0
  %110 = vmatpush2.msra.mxu0 0.0
  %111 = vmatprep.subr.mxu0 0.0
  %112 = vmatpush2.msra.mxu0 0.0
  %113 = vmatprep.subr.mxu0 0.0
  %114 = vmatpush2.msra.mxu0 0.0
  %115 = vmatprep.subr.mxu0 0.0
  %116 = vmatpush2.msra.mxu0 0.0
  %117 = vmatprep.subr.mxu0 0.0
  %118 = vmatpush2.msra.mxu0 0.0
  %119 = vmatprep.subr.mxu0 0.0
  %120 = vmatpush2.msra.mxu0 0.0
  %121 = vmatprep.subr.mxu0 0.0
  %122 = vmatpush2.msra.mxu0 0.0
  %123 = vmatprep.subr.mxu0 0.0
  %124 = vmatpush2.msra.mxu0 0.0
  %125 = vmatprep.subr.mxu0 0.0
  %126 = vmatpush2.msra.mxu0 0.0
  %127 = vmatprep.subr.mxu0 0.0
  %128 = vmatpush2.msra.mxu0 0.0
  %129 = vmatprep.subr.mxu0 0.0
  %130 = vmatpush2.msra.mxu0 0.0
  %131 = vmatprep.subr.mxu0 0.0
  %132 = vmatpush2.msra.mxu0 0.0
  %133 = vmatprep.mubr.f32.mxu0 0.0
  %134 = vmatmul.mubr.f32.gmra.mxu0 %v17
  %v135 = vpop.f32.mrf.mxu0
  %v136 = vadd.f32 %v62, %v135
  %v137 = vpop.f32.mrf.mxu0
  %v138 = vadd.f32 %v66, %v137
  %139 = vmatprep.mubr.f32.mxu0 0.0
  %140 = vmatmul.mubr.f32.gmra.mxu0 %v18
  %v141 = vpop.f32.mrf.mxu0
  %v142 = vadd.f32 %v62, %v141
  %v143 = vpop.f32.mrf.mxu0
  %v144 = vadd.f32 %v66, %v143
  %145 = vmatprep.mubr.f32.mxu0 0.0
  %146 = vmatmul.mubr.f32.gmra.mxu0 %v19
  %v147 = vpop.f32.mrf.mxu0
  %v148 = vadd.f32 %v62, %v147
  %v149 = vpop.f32.mrf.mxu0
  %v150 = vadd.f32 %v66, %v149
  %151 = vmatprep.mubr.f32.mxu0 0.0
  %152 = vmatmul.mubr.f32.gmra.mxu0 %v20
  %v153 = vpop.f32.mrf.mxu0
  %v154 = vadd.f32 %v62, %v153
  %v155 = vpop.f32.mrf.mxu0
  %v156 = vadd.f32 %v66, %v155
  %157 = vmatprep.mubr.f32.mxu0 0.0
  %158 = vmatmul.mubr.f32.gmra.mxu0 %v21
  %v159 = vpop.f32.mrf.mxu0
  %v160 = vadd.f32 %v62, %v159
  %v161 = vpop.f32.mrf.mxu0
  %v162 = vadd.f32 %v66, %v161
  %163 = vmatprep.mubr.f32.mxu0 0.0
  %164 = vmatmul.mubr.f32.gmra.mxu0 %v22
  %v165 = vpop.f32.mrf.mxu0
  %v166 = vadd.f32 %v62, %v165
  %v167 = vpop.f32.mrf.mxu0
  %v168 = vadd.f32 %v66, %v167
  %169 = vmatprep.mubr.f32.mxu0 0.0
  %170 = vmatmul.mubr.f32.gmra.mxu0 %v23
  %v171 = vpop.f32.mrf.mxu0
  %v172 = vadd.f32 %v62, %v171
  %v173 = vpop.f32.mrf.mxu0
  %v174 = vadd.f32 %v66, %v173
  %175 = vmatprep.mubr.f32.mxu0 0.0
  %176 = vmatmul.mubr.f32.gmra.mxu0 %v24
  %v177 = vpop.f32.mrf.mxu0
  %v178 = vadd.f32 %v62, %v177
  %v179 = vpop.f32.mrf.mxu0
  %v180 = vadd.f32 %v66, %v179
  %181 = vdwg.mxu0
  %182 = vst [vmem:[#allocation2] sm:$0xff] %v136
  %183 = vst [vmem:[#allocation2 + $0x8] sm:$0xff] %v138
  %184 = vst [vmem:[#allocation2 + $0x10] sm:$0xff] %v142
  %185 = vst [vmem:[#allocation2 + $0x18] sm:$0xff] %v144
  %186 = vst [vmem:[#allocation2 + $0x20] sm:$0xff] %v148
  %187 = vst [vmem:[#allocation2 + $0x28] sm:$0xff] %v150
  %188 = vst [vmem:[#allocation2 + $0x30] sm:$0xff] %v154
  %189 = vst [vmem:[#allocation2 + $0x38] sm:$0xff] %v156
  %190 = vst [vmem:[#allocation2 + $0x40] sm:$0xff] %v160
  %191 = vst [vmem:[#allocation2 + $0x48] sm:$0xff] %v162
  %192 = vst [vmem:[#allocation2 + $0x50] sm:$0xff] %v166
  %193 = vst [vmem:[#allocation2 + $0x58] sm:$0xff] %v168
  %194 = vst [vmem:[#allocation2 + $0x60] sm:$0xff] %v172
  %195 = vst [vmem:[#allocation2 + $0x68] sm:$0xff] %v174
  %196 = vst [vmem:[#allocation2 + $0x70] sm:$0xff] %v178
  %197 = vst [vmem:[#allocation2 + $0x78] sm:$0xff] %v180
  %vm198 = vcmask 523264
  %199 = vst.msk [vmem:[#allocation3] sm:$0xff] %vm198, 0.0
  %200 = vst.msk [vmem:[#allocation4] sm:$0xff] %vm198, 0.0
  loop: start=0, step=1, limit=8
  $region18: #{_device_core.3} parent=0 // loop_pre_header
    _
  $region19: #{_device_core.3} parent=0 // loop_header
    %s202 = sphi 0, %s206
    %p203 = scmp.ge.s32.totalorder %s202, 8
  $region20: #{_device_core.3} parent=0 // loop_header_branch
    %205 = sbr.rel (%p203) target = $region24
  $region21: #{_device_core.3} parent=0 // loop_body
    %s207 = smul.u32 %s202, 2
    %s208 = smul.addr %s207, 8
    %s209 = scalar_lea.vmem [#allocation2], %s208
    %v210 = vld [vmem:[%s209] sm:$0xff]
    %v211 = vld [vmem:[%s209 + $0x8] sm:$0xff]
    %v212 = vld [vmem:[#allocation3] sm:$0xff]
    %v213 = vld [vmem:[%s2] sm:$0xff]
    %v214 = vld [vmem:[%s2 + $0x8] sm:$0xff]
    %v215 = vld [vmem:[%s2 + $0x10] sm:$0xff]
    %v216 = vld [vmem:[%s2 + $0x18] sm:$0xff]
    %v217 = vld [vmem:[%s2 + $0x20] sm:$0xff]
    %v218 = vld [vmem:[%s2 + $0x28] sm:$0xff]
    %v219 = vld [vmem:[%s2 + $0x30] sm:$0xff]
    %v220 = vld [vmem:[%s2 + $0x38] sm:$0xff]
    %v221 = vld [vmem:[%s2 + $0x40] sm:$0xff]
    %v222 = vld [vmem:[%s2 + $0x48] sm:$0xff]
    %v223 = vld [vmem:[%s2 + $0x50] sm:$0xff]
    %v224 = vld [vmem:[%s2 + $0x58] sm:$0xff]
    %v225 = vld [vmem:[%s2 + $0x60] sm:$0xff]
    %v226 = vld [vmem:[%s2 + $0x68] sm:$0xff]
    %v227 = vld [vmem:[%s2 + $0x70] sm:$0xff]
    %v228 = vld [vmem:[%s2 + $0x78] sm:$0xff]
    %v230 = vsel %vm198, %v212, 0
    %232 = vmatprep.subr.mxu0 0.0
    %233 = vmatpush1.msra.mxu0 0.0
    %234 = vmatprep.subr.mxu0 0.0
    %235 = vmatpush1.msra.mxu0 0.0
    %236 = vmatprep.subr.mxu0 0.0
    %237 = vmatpush1.msra.mxu0 0.0
    %238 = vmatprep.subr.mxu0 0.0
    %239 = vmatpush1.msra.mxu0 0.0
    %240 = vmatprep.subr.mxu0 0.0
    %241 = vmatpush1.msra.mxu0 0.0
    %242 = vmatprep.subr.mxu0 0.0
    %243 = vmatpush1.msra.mxu0 0.0
    %244 = vmatprep.subr.mxu0 0.0
    %245 = vmatpush1.msra.mxu0 0.0
    %246 = vmatprep.subr.mxu0 0.0
    %247 = vmatpush1.msra.mxu0 0.0
    %248 = vmatprep.subr.mxu0 %v228
    %249 = vmatpush1.msra.mxu0 %v227
    %250 = vmatprep.subr.mxu0 %v226
    %251 = vmatpush1.msra.mxu0 %v225
    %252 = vmatprep.subr.mxu0 %v224
    %253 = vmatpush1.msra.mxu0 %v223
    %254 = vmatprep.subr.mxu0 %v222
    %255 = vmatpush1.msra.mxu0 %v221
    %256 = vmatprep.subr.mxu0 %v220
    %257 = vmatpush1.msra.mxu0 %v219
    %258 = vmatprep.subr.mxu0 %v218
    %259 = vmatpush1.msra.mxu0 %v217
    %260 = vmatprep.subr.mxu0 %v216
    %261 = vmatpush1.msra.mxu0 %v215
    %262 = vmatprep.subr.mxu0 %v214
    %263 = vmatpush1.msra.mxu0 %v213
    %264 = vmatprep.subr.mxu0 0.0
    %265 = vmatpush2.msra.mxu0 0.0
    %266 = vmatprep.subr.mxu0 0.0
    %267 = vmatpush2.msra.mxu0 0.0
    %268 = vmatprep.subr.mxu0 0.0
    %269 = vmatpush2.msra.mxu0 0.0
    %270 = vmatprep.subr.mxu0 0.0
    %271 = vmatpush2.msra.mxu0 0.0
    %272 = vmatprep.subr.mxu0 0.0
    %273 = vmatpush2.msra.mxu0 0.0
    %274 = vmatprep.subr.mxu0 0.0
    %275 = vmatpush2.msra.mxu0 0.0
    %276 = vmatprep.subr.mxu0 0.0
    %277 = vmatpush2.msra.mxu0 0.0
    %278 = vmatprep.subr.mxu0 0.0
    %279 = vmatpush2.msra.mxu0 0.0
    %280 = vmatprep.subr.mxu0 0.0
    %281 = vmatpush2.msra.mxu0 0.0
    %282 = vmatprep.subr.mxu0 0.0
    %283 = vmatpush2.msra.mxu0 0.0
    %284 = vmatprep.subr.mxu0 0.0
    %285 = vmatpush2.msra.mxu0 0.0
    %286 = vmatprep.subr.mxu0 0.0
    %287 = vmatpush2.msra.mxu0 0.0
    %288 = vmatprep.subr.mxu0 0.0
    %289 = vmatpush2.msra.mxu0 0.0
    %290 = vmatprep.subr.mxu0 0.0
    %291 = vmatpush2.msra.mxu0 0.0
    %292 = vmatprep.subr.mxu0 0.0
    %293 = vmatpush2.msra.mxu0 0.0
    %294 = vmatprep.subr.mxu0 0.0
    %295 = vmatpush2.msra.mxu0 0.0
    %296 = vmatprep.mubr.f32.mxu0 0.0
    %297 = vmatmul.mubr.f32.gmra.mxu0 %v230
    %v298 = vpop.f32.mrf.mxu0
    %v299 = vadd.f32 0.0, %v298
    %v300 = vpop.f32.mrf.mxu0
    %v301 = vadd.f32 0.0, %v300
    %302 = vdwg.mxu0
    %v303 = vadd.f32 %v210, %v299
    %v304 = vadd.f32 %v211, %v301
    %v305 = vxor.u32 %v303, 2147483648
    %v306 = vxor.u32 %v304, 2147483648
    %v307 = vmul.f32 %v305, 1.442695
    %v308 = vpow.pop %v307
    %v309 = vmul.f32 %v306, 1.442695
    %v310 = vpow.pop %v309
    %v311 = vadd.f32 %v308, 1.0
    %v312 = vadd.f32 %v310, 1.0
    %v313 = vrcp.pop %v311
    %v314 = vmul.f32 1.0, %v313
    %v315 = vrcp.pop %v312
    %v316 = vmul.f32 1.0, %v315
    %v317 = vtanh.pop %v304
    %v318 = vld [vmem:[#allocation4] sm:$0xff]
    %320 = vrot.lane.b32.xlu0 %v318, 64
    %v321 = vpop.permute.xlu0 %320
    %v323 = vmul.f32 %v314, %v321
    %v324 = vmul.f32 %v314, %v317
    %326 = vrot.lane.b32.xlu0 %v324, 64
    %v327 = vpop.permute.xlu0 %326
    %v329 = vadd.f32 %v323, %v327
    %v330 = vtanh.pop %v329
    %v331 = vmul.f32 %v316, %v330
    %333 = vrot.lane.b32.xlu0 %v329, 64
    %v334 = vpop.permute.xlu0 %333
    %336 = vst.msk [vmem:[#allocation4] sm:$0xff] %vm198, %v334
    %338 = vrot.lane.b32.xlu0 %v331, 64
    %v339 = vpop.permute.xlu0 %338
    %341 = vst.msk [vmem:[#allocation3] sm:$0xff] %vm198, %v339
    %s342 = smul.u32 %s202, 8
    %s343 = scalar_lea.vmem %s4, %s342
    %344 = vst.msk [vmem:[%s343] sm:$0xff] %vm198, %v339
  $region22: #{_device_core.3} parent=0 // loop_footer
    %s206 = sadd.s32 1, %s202
  $region23: #{_device_core.3} parent=0 // loop_footer_branch
    %201 = sbr.rel target = $region19
  $region24: #{_device_core.3} parent=0 // loop_exit
    _
  // Predicated region
  $region25: #{_device_core.3} parent=0 // pred_check
    _
  $region26: #{_device_core.3} parent=0 // pred_check_branch
    %346 = sbr.rel (0) target = $region28
  $region27: #{_device_core.3} parent=0 // pred_region
    _
  $region28: #{_device_core.3} parent=0 // pred_fallthru
    _
  // Predicated region
  $region29: #{_device_core.3} parent=0 // pred_check
    _
  $region30: #{_device_core.3} parent=0 // pred_check_branch
    %348 = sbr.rel (0) target = $region32
  $region31: #{_device_core.3} parent=0 // pred_region
    _
  $region32: #{_device_core.3} parent=0 // pred_fallthru
    _

// kernel: _device_core.5
$region0: #{_device_core.5}
  #allocation0 [shape = 'u32[]', space=smem, size = 0x4, offset = 0x4, fixed_abs, tag = 'smem constant byte address 0x4 - core index']
  #allocation1 [shape = 'u32[144,128]{1,0:T(1,128)}', space=vmem, size = 0x12000, scoped, tag = 'internal scratch']
  #allocation2 [shape = 's32[1]{0}', space=sflag, size = 0x4, scoped, tag = 'scoped memory for _device_core.5']
  #allocation3 [shape = 'u8[512]{0}', space=smem, size = 0x200, scoped, tag = 'prefetched SMEM operand 0']
  #allocation4 [shape = 'f32[1,1]{1,0:T(1,128)S(1)}', space=vmem, size = 0x200, scoped, tag = 'scoped memory for _device_core.5']
  %s0 = inlined_call_operand.vmem [shape: s32[2], index: 0, kind: input, shape index: {}]
  %s1 = inlined_call_operand.vmem [shape: f32[2,8,64], index: 1, kind: input, shape index: {}]
  %s2 = inlined_call_operand.vmem [shape: f32[1,64], index: 2, kind: input, shape index: {}]
  %s3 = inlined_call_operand.vmem [shape: f32[64,64], index: 3, kind: input, shape index: {}]
  %s4 = inlined_call_operand.vmem [shape: f32[64,64], index: 4, kind: input, shape index: {}]
  %s5 = inlined_call_operand.vmem [shape: f32[1,64], index: 5, kind: input, shape index: {}]
  %s6 = inlined_call_operand.vmem [shape: f32[1,64], index: 6, kind: input, shape index: {}]
  %s7 = inlined_call_operand.<no memory space> [shape: f32[1,1], index: 7, kind: input, shape index: {}]
  %s8 = inlined_call_operand.vmem [shape: f32[2,8,8], index: 8, kind: output, shape index: {0}]
  %s9 = inlined_call_operand.hbm [shape: f32[2,8,64], index: 9, kind: output, shape index: {1}]
  %s10 = inlined_call_operand.vmem [shape: f32[2,8,1], index: 10, kind: output, shape index: {2}]
  %11 = xla_tuple %s8, %s9, %s10
  %s12 = sld [smem:[#allocation0]]
  $region77: #{_device_core.5} parent=0
    _
  %s14 = ssub.s32 1, %s12
  %s15 = scalar_select 0, %s14, %s12
  %s16 = sshll.u32 %s0, 4
  %s17 = int_to_ptr.vmem [resolvable:$true] %s16
  %19 = dma.vmem_to_smem %s17, 16, [#allocation3], [#allocation2]
  %v20 = vstv %s7
  %21 = vst [vmem:[#allocation4] sm:$0x1] %v20
  %22 = dma.done [#allocation2], 16
  %23 = sfence
  $region1: #{_device_core.5} parent=0
    #allocation5 [shape = 'u8[8192]{0}', space=vmem, size = 0x2000, scoped, tag = 'output window, operand 1']
    #allocation6 [shape = 's32[2]{0}', space=sflag, size = 0x8, scoped, tag = 'scoped memory for _device_core.5']
    %24 = vsyncpa [#allocation6], 0
    %s25 = scalar_lea.sflag [#allocation6], 1
    %26 = vsyncpa %s25, 0
    loop: start=0, step=1, limit=4
    $region2: #{_device_core.5} parent=1 // loop_pre_header
      _
    $region3: #{_device_core.5} parent=1 // loop_header
      %s28 = sphi 0, %s32
      %p29 = scmp.ge.s32.totalorder %s28, 4
      %s38 = sphi 0, %s40
      %s41 = sphi 0, %s38
      %s42 = sphi 0, %s41
      %s58 = sphi 0, %s42
      %s62 = sphi 0, %s62
      %s64 = sphi 0, %s62
      %s65 = sphi 0, %s64
      %s79 = sphi 0, %s65
      %s83 = sphi 0, %s83
      %s85 = sphi 0, %s83
      %s86 = sphi 0, %s85
      %s100 = sphi 0, %s86
      %s104 = sphi 0, %s104
      %s106 = sphi 0, %s104
      %s107 = sphi 0, %s106
      %s121 = sphi 0, %s107
      %s125 = sphi 0, %s125
      %s127 = sphi 0, %s125
      %s128 = sphi 0, %s127
      %s142 = sphi 0, %s128
      %s146 = sphi 0, %s146
      %s148 = sphi 0, %s146
      %s149 = sphi 0, %s148
      %s163 = sphi 0, %s149
      %s167 = sphi 0, %s167
      %s169 = sphi 0, %s167
      %s170 = sphi 0, %s169
      %s184 = sphi 0, %s170
      %s190 = sphi 0, %s192
      %s193 = sphi 0, %s190
      %s194 = sphi 0, %s193
      %s210 = sphi 0, %s194
      %s216 = sphi 0, %s218
      %s219 = sphi 0, %s216
      %s220 = sphi 0, %s219
      %s236 = sphi 0, %s220
      %s242 = sphi 0, %s244
      %s245 = sphi 0, %s242
      %s246 = sphi 0, %s245
      %s262 = sphi 0, %s246
    $region4: #{_device_core.5} parent=1 // loop_header_branch
      %31 = sbr.rel (%p29) target = $region8
    $region5: #{_device_core.5} parent=1 // loop_body
      %s33 = ssub.s32 %s28, 1
      %s34 = ssub.s32 %s28, 2
      %s35 = sadd.s32 %s28, 1
      %s36 = ssub.s32 %s28, %s35
      %p37 = scmp.eq.s32.totalorder %s36, 0
      %s39 = sadd.s32 %s38, 1
      %s40 = scalar_select %p37, %s38, %s39
      %p43 = pneg %p37
      %p44 = scmp.eq.s32.totalorder %s28, 1
      %p45 = por %p43, %p44
      %p46 = scmp.ne.s32.totalorder %s38, %s41
      %p47 = scmp.eq.s32.totalorder %s28, 0
      %p48 = por %p46, %p47
      %p49 = scmp.ne.s32.totalorder %s38, %s41
      %p50 = scmp.eq.s32.totalorder %s33, 1
      %p51 = por %p49, %p50
      %p52 = scmp.ne.s32.totalorder %s41, %s42
      %p53 = scmp.eq.s32.totalorder %s33, 0
      %p54 = por %p52, %p53
      %p55 = scmp.ne.s32.totalorder %s41, %s42
      %p56 = scmp.eq.s32.totalorder %s34, 1
      %p57 = por %p55, %p56
      %p59 = scmp.ne.s32.totalorder %s42, %s58
      %p60 = scmp.eq.s32.totalorder %s34, 0
      %p61 = por %p59, %p60
      %s63 = sadd.s32 %s62, 1
      %p66 = scmp.eq.s32.totalorder %s28, 1
      %p67 = scmp.ne.s32.totalorder %s62, %s64
      %p68 = scmp.eq.s32.totalorder %s28, 0
      %p69 = por %p67, %p68
      %p70 = scmp.ne.s32.totalorder %s62, %s64
      %p71 = scmp.eq.s32.totalorder %s33, 1
      %p72 = por %p70, %p71
      %p73 = scmp.ne.s32.totalorder %s64, %s65
      %p74 = scmp.eq.s32.totalorder %s33, 0
      %p75 = por %p73, %p74
      %p76 = scmp.ne.s32.totalorder %s64, %s65
      %p77 = scmp.eq.s32.totalorder %s34, 1
      %p78 = por %p76, %p77
      %p80 = scmp.ne.s32.totalorder %s65, %s79
      %p81 = scmp.eq.s32.totalorder %s34, 0
      %p82 = por %p80, %p81
      %s84 = sadd.s32 %s83, 1
      %p87 = scmp.eq.s32.totalorder %s28, 1
      %p88 = scmp.ne.s32.totalorder %s83, %s85
      %p89 = scmp.eq.s32.totalorder %s28, 0
      %p90 = por %p88, %p89
      %p91 = scmp.ne.s32.totalorder %s83, %s85
      %p92 = scmp.eq.s32.totalorder %s33, 1
      %p93 = por %p91, %p92
      %p94 = scmp.ne.s32.totalorder %s85, %s86
      %p95 = scmp.eq.s32.totalorder %s33, 0
      %p96 = por %p94, %p95
      %p97 = scmp.ne.s32.totalorder %s85, %s86
      %p98 = scmp.eq.s32.totalorder %s34, 1
      %p99 = por %p97, %p98
      %p101 = scmp.ne.s32.totalorder %s86, %s100
      %p102 = scmp.eq.s32.totalorder %s34, 0
      %p103 = por %p101, %p102
      %s105 = sadd.s32 %s104, 1
      %p108 = scmp.eq.s32.totalorder %s28, 1
      %p109 = scmp.ne.s32.totalorder %s104, %s106
      %p110 = scmp.eq.s32.totalorder %s28, 0
      %p111 = por %p109, %p110
      %p112 = scmp.ne.s32.totalorder %s104, %s106
      %p113 = scmp.eq.s32.totalorder %s33, 1
      %p114 = por %p112, %p113
      %p115 = scmp.ne.s32.totalorder %s106, %s107
      %p116 = scmp.eq.s32.totalorder %s33, 0
      %p117 = por %p115, %p116
      %p118 = scmp.ne.s32.totalorder %s106, %s107
      %p119 = scmp.eq.s32.totalorder %s34, 1
      %p120 = por %p118, %p119
      %p122 = scmp.ne.s32.totalorder %s107, %s121
      %p123 = scmp.eq.s32.totalorder %s34, 0
      %p124 = por %p122, %p123
      %s126 = sadd.s32 %s125, 1
      %p129 = scmp.eq.s32.totalorder %s28, 1
      %p130 = scmp.ne.s32.totalorder %s125, %s127
      %p131 = scmp.eq.s32.totalorder %s28, 0
      %p132 = por %p130, %p131
      %p133 = scmp.ne.s32.totalorder %s125, %s127
      %p134 = scmp.eq.s32.totalorder %s33, 1
      %p135 = por %p133, %p134
      %p136 = scmp.ne.s32.totalorder %s127, %s128
      %p137 = scmp.eq.s32.totalorder %s33, 0
      %p138 = por %p136, %p137
      %p139 = scmp.ne.s32.totalorder %s127, %s128
      %p140 = scmp.eq.s32.totalorder %s34, 1
      %p141 = por %p139, %p140
      %p143 = scmp.ne.s32.totalorder %s128, %s142
      %p144 = scmp.eq.s32.totalorder %s34, 0
      %p145 = por %p143, %p144
      %s147 = sadd.s32 %s146, 1
      %p150 = scmp.eq.s32.totalorder %s28, 1
      %p151 = scmp.ne.s32.totalorder %s146, %s148
      %p152 = scmp.eq.s32.totalorder %s28, 0
      %p153 = por %p151, %p152
      %p154 = scmp.ne.s32.totalorder %s146, %s148
      %p155 = scmp.eq.s32.totalorder %s33, 1
      %p156 = por %p154, %p155
      %p157 = scmp.ne.s32.totalorder %s148, %s149
      %p158 = scmp.eq.s32.totalorder %s33, 0
      %p159 = por %p157, %p158
      %p160 = scmp.ne.s32.totalorder %s148, %s149
      %p161 = scmp.eq.s32.totalorder %s34, 1
      %p162 = por %p160, %p161
      %p164 = scmp.ne.s32.totalorder %s149, %s163
      %p165 = scmp.eq.s32.totalorder %s34, 0
      %p166 = por %p164, %p165
      %s168 = sadd.s32 %s167, 1
      %p171 = scmp.eq.s32.totalorder %s28, 1
      %p172 = scmp.ne.s32.totalorder %s167, %s169
      %p173 = scmp.eq.s32.totalorder %s28, 0
      %p174 = por %p172, %p173
      %p175 = scmp.ne.s32.totalorder %s167, %s169
      %p176 = scmp.eq.s32.totalorder %s33, 1
      %p177 = por %p175, %p176
      %p178 = scmp.ne.s32.totalorder %s169, %s170
      %p179 = scmp.eq.s32.totalorder %s33, 0
      %p180 = por %p178, %p179
      %p181 = scmp.ne.s32.totalorder %s169, %s170
      %p182 = scmp.eq.s32.totalorder %s34, 1
      %p183 = por %p181, %p182
      %p185 = scmp.ne.s32.totalorder %s170, %s184
      %p186 = scmp.eq.s32.totalorder %s34, 0
      %p187 = por %p185, %p186
      %s188 = ssub.s32 %s28, %s35
      %p189 = scmp.eq.s32.totalorder %s188, 0
      %s191 = sadd.s32 %s190, 1
      %s192 = scalar_select %p189, %s190, %s191
      %p195 = pneg %p189
      %p196 = scmp.eq.s32.totalorder %s28, 1
      %p197 = por %p195, %p196
      %p198 = scmp.ne.s32.totalorder %s190, %s193
      %p199 = scmp.eq.s32.totalorder %s28, 0
      %p200 = por %p198, %p199
      %p201 = scmp.ne.s32.totalorder %s190, %s193
      %p202 = scmp.eq.s32.totalorder %s33, 1
      %p203 = por %p201, %p202
      %p204 = scmp.ne.s32.totalorder %s193, %s194
      %p205 = scmp.eq.s32.totalorder %s33, 0
      %p206 = por %p204, %p205
      %p207 = scmp.ne.s32.totalorder %s193, %s194
      %p208 = scmp.eq.s32.totalorder %s34, 1
      %p209 = por %p207, %p208
      %p211 = scmp.ne.s32.totalorder %s194, %s210
      %p212 = scmp.eq.s32.totalorder %s34, 0
      %p213 = por %p211, %p212
      %s214 = ssub.s32 %s28, %s35
      %p215 = scmp.eq.s32.totalorder %s214, 0
      %s217 = sadd.s32 %s216, 1
      %s218 = scalar_select %p215, %s216, %s217
      %p221 = pneg %p215
      %p222 = scmp.eq.s32.totalorder %s28, 1
      %p223 = por %p221, %p222
      %p224 = scmp.ne.s32.totalorder %s216, %s219
      %p225 = scmp.eq.s32.totalorder %s28, 0
      %p226 = por %p224, %p225
      %p227 = scmp.ne.s32.totalorder %s216, %s219
      %p228 = scmp.eq.s32.totalorder %s33, 1
      %p229 = por %p227, %p228
      %p230 = scmp.ne.s32.totalorder %s219, %s220
      %p231 = scmp.eq.s32.totalorder %s33, 0
      %p232 = por %p230, %p231
      %p233 = scmp.ne.s32.totalorder %s219, %s220
      %p234 = scmp.eq.s32.totalorder %s34, 1
      %p235 = por %p233, %p234
      %p237 = scmp.ne.s32.totalorder %s220, %s236
      %p238 = scmp.eq.s32.totalorder %s34, 0
      %p239 = por %p237, %p238
      %s240 = ssub.s32 %s28, %s35
      %p241 = scmp.eq.s32.totalorder %s240, 0
      %s243 = sadd.s32 %s242, 1
      %s244 = scalar_select %p241, %s242, %s243
      %p247 = pneg %p241
      %p248 = scmp.eq.s32.totalorder %s28, 1
      %p249 = por %p247, %p248
      %p250 = scmp.ne.s32.totalorder %s242, %s245
      %p251 = scmp.eq.s32.totalorder %s28, 0
      %p252 = por %p250, %p251
      %p253 = scmp.ne.s32.totalorder %s242, %s245
      %p254 = scmp.eq.s32.totalorder %s33, 1
      %p255 = por %p253, %p254
      %p256 = scmp.ne.s32.totalorder %s245, %s246
      %p257 = scmp.eq.s32.totalorder %s33, 0
      %p258 = por %p256, %p257
      %p259 = scmp.ne.s32.totalorder %s245, %s246
      %p260 = scmp.eq.s32.totalorder %s34, 1
      %p261 = por %p259, %p260
      %p263 = scmp.ne.s32.totalorder %s246, %s262
      %p264 = scmp.eq.s32.totalorder %s34, 0
      %p265 = por %p263, %p264
      %p266 = scmp.le.s32.totalorder 1, %s28
      %p267 = scmp.lt.s32.totalorder %s28, 3
      %p268 = pnand %p266, %p267
      %p269 = pneg %p268
      // Predicated region
      $region9: #{_device_core.5} parent=5 // pred_check
        _
      $region10: #{_device_core.5} parent=5 // pred_check_branch
        %271 = sbr.rel (%p268) target = $region12
      $region11: #{_device_core.5} parent=5 // pred_region
        %s272 = ssub.s32 %s28, 1
        // Predicated region
        $region13: #{_device_core.5} parent=11 // pred_check
          %p273 = pneg %p75
        $region14: #{_device_core.5} parent=11 // pred_check_branch
          %275 = sbr.rel (%p273) target = $region16
        $region15: #{_device_core.5} parent=11 // pred_region
          _
        $region16: #{_device_core.5} parent=11 // pred_fallthru
          _
        // Predicated region
        $region17: #{_device_core.5} parent=11 // pred_check
          %p276 = pneg %p96
        $region18: #{_device_core.5} parent=11 // pred_check_branch
          %278 = sbr.rel (%p276) target = $region20
        $region19: #{_device_core.5} parent=11 // pred_region
          _
        $region20: #{_device_core.5} parent=11 // pred_fallthru
          _
        // Predicated region
        $region21: #{_device_core.5} parent=11 // pred_check
          %p279 = pneg %p117
        $region22: #{_device_core.5} parent=11 // pred_check_branch
          %281 = sbr.rel (%p279) target = $region24
        $region23: #{_device_core.5} parent=11 // pred_region
          _
        $region24: #{_device_core.5} parent=11 // pred_fallthru
          _
        // Predicated region
        $region25: #{_device_core.5} parent=11 // pred_check
          %p282 = pneg %p138
        $region26: #{_device_core.5} parent=11 // pred_check_branch
          %284 = sbr.rel (%p282) target = $region28
        $region27: #{_device_core.5} parent=11 // pred_region
          _
        $region28: #{_device_core.5} parent=11 // pred_fallthru
          _
        // Predicated region
        $region29: #{_device_core.5} parent=11 // pred_check
          %p285 = pneg %p159
        $region30: #{_device_core.5} parent=11 // pred_check_branch
          %287 = sbr.rel (%p285) target = $region32
        $region31: #{_device_core.5} parent=11 // pred_region
          _
        $region32: #{_device_core.5} parent=11 // pred_fallthru
          _
        // Predicated region
        $region33: #{_device_core.5} parent=11 // pred_check
          %p288 = pneg %p180
        $region34: #{_device_core.5} parent=11 // pred_check_branch
          %290 = sbr.rel (%p288) target = $region36
        $region35: #{_device_core.5} parent=11 // pred_region
          _
        $region36: #{_device_core.5} parent=11 // pred_fallthru
          _
      $region12: #{_device_core.5} parent=5 // pred_fallthru
        _
      %p291 = scmp.lt.s32.totalorder %s28, 2
      // Predicated region
      $region37: #{_device_core.5} parent=5 // pred_check
        %p292 = pneg %p291
      $region38: #{_device_core.5} parent=5 // pred_check_branch
        %294 = sbr.rel (%p292) target = $region40
      $region39: #{_device_core.5} parent=5 // pred_region
        // Predicated region
        $region41: #{_device_core.5} parent=39 // pred_check
          %p295 = pneg %p48
        $region42: #{_device_core.5} parent=39 // pred_check_branch
          %297 = sbr.rel (%p295) target = $region44
        $region43: #{_device_core.5} parent=39 // pred_region
          %p298 = scmp.lt.s32.totalorder %s28, 1
          %s299 = scalar_select %p298, %s28, 1
          %s300 = smul.addr %s299, 8
          %s301 = scalar_lea.vmem %s1, %s300
        $region44: #{_device_core.5} parent=39 // pred_fallthru
          _
      $region40: #{_device_core.5} parent=5 // pred_fallthru
        _
      %p302 = scmp.le.s32.totalorder 1, %s28
      %p303 = scmp.lt.s32.totalorder %s28, 3
      %p304 = pnand %p302, %p303
      %p305 = pneg %p304
      // Predicated region
      $region45: #{_device_core.5} parent=5 // pred_check
        _
      $region46: #{_device_core.5} parent=5 // pred_check_branch
        %307 = sbr.rel (%p304) target = $region48
      $region47: #{_device_core.5} parent=5 // pred_region
        %s308 = ssub.s32 %s28, 1
        %p309 = scmp.lt.s32.totalorder %s33, 1
        %s310 = scalar_select %p309, %s33, 1
        %s311 = smul.addr %s310, 8
        %s312 = scalar_lea.vmem %s1, %s311
        %p313 = pneg %p54
        %p314 = pneg %p51
        %p315 = pneg %p75
        %p316 = pneg %p72
        %p317 = pneg %p96
        %p318 = pneg %p93
        %p319 = pneg %p117
        %p320 = pneg %p114
        %p321 = pneg %p138
        %p322 = pneg %p135
        %p323 = pneg %p159
        %p324 = pneg %p156
        %p325 = pneg %p180
        %p326 = pneg %p177
        %p327 = pneg %p206
        %p328 = pneg %p203
        %p329 = scmp.lt.s32.totalorder %s33, 1
        %s330 = scalar_select %p329, %s33, 1
        %s331 = smul.addr %s330, 8
        %s332 = scalar_lea.vmem %s8, %s331
        %p333 = pneg %p232
        %p334 = pneg %p229
        %s335 = sand.u32 %s219, 1
        %s336 = scalar_lea.sflag [#allocation6], %s335
        %s337 = sand.u32 %s219, 1
        %s338 = smul.addr %s337, 8
        %s339 = scalar_lea.vmem [#allocation5], %s338
        %p340 = pneg %p258
        %p341 = pneg %p255
        %p342 = scmp.lt.s32.totalorder %s33, 1
        %s343 = scalar_select %p342, %s33, 1
        %s344 = smul.addr %s343, 8
        %s345 = scalar_lea.vmem %s10, %s344
        %p346 = scmp.lt.s32.totalorder %s33, 1
        %s347 = scalar_select %p346, %s33, 1
        %s348 = smul.addr %s347, 8
        %s349 = scalar_lea.vmem %s1, %s348
        %p350 = scmp.lt.s32.totalorder %s33, 1
        %s351 = scalar_select %p350, %s33, 1
        %s352 = smul.addr %s351, 8
        %s353 = scalar_lea.vmem %s8, %s352
        %p354 = scmp.lt.s32.totalorder %s33, 1
        %s355 = scalar_select %p354, %s33, 1
        %s356 = smul.addr %s355, 8
        %s357 = scalar_lea.vmem %s10, %s356
        %s358 = sld [smem:[#allocation3 + %s33]]
        %v359 = vld [vmem:[%s349] sm:$0xff]
        %v360 = vld [vmem:[%s2] sm:$0x1]
        %v362 = vlaneseq
        %v363 = vshrl.u32 %v362, 7
        %v364 = vsub.s32 0, %v363
        %v365 = vrot.slane %v360, %v364
        %v367 = vadd.f32 %v359, %v365
        %v368 = vld [vmem:[%s3] sm:$0xff]
        %v369 = vld [vmem:[%s3 + $0x8] sm:$0xff]
        %v370 = vld [vmem:[%s3 + $0x10] sm:$0xff]
        %v371 = vld [vmem:[%s3 + $0x18] sm:$0xff]
        %v372 = vld [vmem:[%s3 + $0x20] sm:$0xff]
        %v373 = vld [vmem:[%s3 + $0x28] sm:$0xff]
        %v374 = vld [vmem:[%s3 + $0x30] sm:$0xff]
        %v375 = vld [vmem:[%s3 + $0x38] sm:$0xff]
        %vm376 = vcmask 523264
        %v378 = vsel %vm376, %v367, 0
        %380 = vmatprep.subr.mxu0 0.0
        %381 = vmatpush1.msra.mxu0 0.0
        %382 = vmatprep.subr.mxu0 0.0
        %383 = vmatpush1.msra.mxu0 0.0
        %384 = vmatprep.subr.mxu0 0.0
        %385 = vmatpush1.msra.mxu0 0.0
        %386 = vmatprep.subr.mxu0 0.0
        %387 = vmatpush1.msra.mxu0 0.0
        %388 = vmatprep.subr.mxu0 0.0
        %389 = vmatpush1.msra.mxu0 0.0
        %390 = vmatprep.subr.mxu0 0.0
        %391 = vmatpush1.msra.mxu0 0.0
        %392 = vmatprep.subr.mxu0 0.0
        %393 = vmatpush1.msra.mxu0 0.0
        %394 = vmatprep.subr.mxu0 0.0
        %395 = vmatpush1.msra.mxu0 0.0
        %396 = vmatprep.subr.mxu0 0.0
        %397 = vmatpush1.msra.mxu0 %v375
        %398 = vmatprep.subr.mxu0 0.0
        %399 = vmatpush1.msra.mxu0 %v374
        %400 = vmatprep.subr.mxu0 0.0
        %401 = vmatpush1.msra.mxu0 %v373
        %402 = vmatprep.subr.mxu0 0.0
        %403 = vmatpush1.msra.mxu0 %v372
        %404 = vmatprep.subr.mxu0 0.0
        %405 = vmatpush1.msra.mxu0 %v371
        %406 = vmatprep.subr.mxu0 0.0
        %407 = vmatpush1.msra.mxu0 %v370
        %408 = vmatprep.subr.mxu0 0.0
        %409 = vmatpush1.msra.mxu0 %v369
        %410 = vmatprep.subr.mxu0 0.0
        %411 = vmatpush1.msra.mxu0 %v368
        %412 = vmatprep.subr.mxu0 0.0
        %413 = vmatpush2.msra.mxu0 0.0
        %414 = vmatprep.subr.mxu0 0.0
        %415 = vmatpush2.msra.mxu0 0.0
        %416 = vmatprep.subr.mxu0 0.0
        %417 = vmatpush2.msra.mxu0 0.0
        %418 = vmatprep.subr.mxu0 0.0
        %419 = vmatpush2.msra.mxu0 0.0
        %420 = vmatprep.subr.mxu0 0.0
        %421 = vmatpush2.msra.mxu0 0.0
        %422 = vmatprep.subr.mxu0 0.0
        %423 = vmatpush2.msra.mxu0 0.0
        %424 = vmatprep.subr.mxu0 0.0
        %425 = vmatpush2.msra.mxu0 0.0
        %426 = vmatprep.subr.mxu0 0.0
        %427 = vmatpush2.msra.mxu0 0.0
        %428 = vmatprep.subr.mxu0 0.0
        %429 = vmatpush2.msra.mxu0 0.0
        %430 = vmatprep.subr.mxu0 0.0
        %431 = vmatpush2.msra.mxu0 0.0
        %432 = vmatprep.subr.mxu0 0.0
        %433 = vmatpush2.msra.mxu0 0.0
        %434 = vmatprep.subr.mxu0 0.0
        %435 = vmatpush2.msra.mxu0 0.0
        %436 = vmatprep.subr.mxu0 0.0
        %437 = vmatpush2.msra.mxu0 0.0
        %438 = vmatprep.subr.mxu0 0.0
        %439 = vmatpush2.msra.mxu0 0.0
        %440 = vmatprep.subr.mxu0 0.0
        %441 = vmatpush2.msra.mxu0 0.0
        %442 = vmatprep.subr.mxu0 0.0
        %443 = vmatpush2.msra.mxu0 0.0
        %444 = vmatprep.mubr.f32.mxu0 0.0
        %445 = vmatmul.mubr.f32.gmra.mxu0 %v378
        %v446 = vpop.f32.mrf.mxu0
        %v447 = vadd.f32 0.0, %v446
        %v448 = vpop.f32.mrf.mxu0
        %449 = vdwg.mxu0
        %v450 = vld [vmem:[%s4] sm:$0xff]
        %v451 = vld [vmem:[%s4 + $0x8] sm:$0xff]
        %v452 = vld [vmem:[%s4 + $0x10] sm:$0xff]
        %v453 = vld [vmem:[%s4 + $0x18] sm:$0xff]
        %v454 = vld [vmem:[%s4 + $0x20] sm:$0xff]
        %v455 = vld [vmem:[%s4 + $0x28] sm:$0xff]
        %v456 = vld [vmem:[%s4 + $0x30] sm:$0xff]
        %v457 = vld [vmem:[%s4 + $0x38] sm:$0xff]
        %458 = vmatprep.subr.mxu0 0.0
        %459 = vmatpush1.msra.mxu0 0.0
        %460 = vmatprep.subr.mxu0 0.0
        %461 = vmatpush1.msra.mxu0 0.0
        %462 = vmatprep.subr.mxu0 0.0
        %463 = vmatpush1.msra.mxu0 0.0
        %464 = vmatprep.subr.mxu0 0.0
        %465 = vmatpush1.msra.mxu0 0.0
        %466 = vmatprep.subr.mxu0 0.0
        %467 = vmatpush1.msra.mxu0 0.0
        %468 = vmatprep.subr.mxu0 0.0
        %469 = vmatpush1.msra.mxu0 0.0
        %470 = vmatprep.subr.mxu0 0.0
        %471 = vmatpush1.msra.mxu0 0.0
        %472 = vmatprep.subr.mxu0 0.0
        %473 = vmatpush1.msra.mxu0 0.0
        %474 = vmatprep.subr.mxu0 0.0
        %475 = vmatpush1.msra.mxu0 %v457
        %476 = vmatprep.subr.mxu0 0.0
        %477 = vmatpush1.msra.mxu0 %v456
        %478 = vmatprep.subr.mxu0 0.0
        %479 = vmatpush1.msra.mxu0 %v455
        %480 = vmatprep.subr.mxu0 0.0
        %481 = vmatpush1.msra.mxu0 %v454
        %482 = vmatprep.subr.mxu0 0.0
        %483 = vmatpush1.msra.mxu0 %v453
        %484 = vmatprep.subr.mxu0 0.0
        %485 = vmatpush1.msra.mxu0 %v452
        %486 = vmatprep.subr.mxu0 0.0
        %487 = vmatpush1.msra.mxu0 %v451
        %488 = vmatprep.subr.mxu0 0.0
        %489 = vmatpush1.msra.mxu0 %v450
        %490 = vmatprep.subr.mxu0 0.0
        %491 = vmatpush2.msra.mxu0 0.0
        %492 = vmatprep.subr.mxu0 0.0
        %493 = vmatpush2.msra.mxu0 0.0
        %494 = vmatprep.subr.mxu0 0.0
        %495 = vmatpush2.msra.mxu0 0.0
        %496 = vmatprep.subr.mxu0 0.0
        %497 = vmatpush2.msra.mxu0 0.0
        %498 = vmatprep.subr.mxu0 0.0
        %499 = vmatpush2.msra.mxu0 0.0
        %500 = vmatprep.subr.mxu0 0.0
        %501 = vmatpush2.msra.mxu0 0.0
        %502 = vmatprep.subr.mxu0 0.0
        %503 = vmatpush2.msra.mxu0 0.0
        %504 = vmatprep.subr.mxu0 0.0
        %505 = vmatpush2.msra.mxu0 0.0
        %506 = vmatprep.subr.mxu0 0.0
        %507 = vmatpush2.msra.mxu0 0.0
        %508 = vmatprep.subr.mxu0 0.0
        %509 = vmatpush2.msra.mxu0 0.0
        %510 = vmatprep.subr.mxu0 0.0
        %511 = vmatpush2.msra.mxu0 0.0
        %512 = vmatprep.subr.mxu0 0.0
        %513 = vmatpush2.msra.mxu0 0.0
        %514 = vmatprep.subr.mxu0 0.0
        %515 = vmatpush2.msra.mxu0 0.0
        %516 = vmatprep.subr.mxu0 0.0
        %517 = vmatpush2.msra.mxu0 0.0
        %518 = vmatprep.subr.mxu0 0.0
        %519 = vmatpush2.msra.mxu0 0.0
        %520 = vmatprep.subr.mxu0 0.0
        %521 = vmatpush2.msra.mxu0 0.0
        %522 = vmatprep.mubr.f32.mxu0 0.0
        %523 = vmatmul.mubr.f32.gmra.mxu0 %v378
        %v524 = vpop.f32.mrf.mxu0
        %v525 = vadd.f32 0.0, %v524
        %v526 = vpop.f32.mrf.mxu0
        %527 = vdwg.mxu0
        %v529 = vsel %vm376, %v447, 0
        %v532 = vsel %vm376, %v525, 0
        %534 = vmatprep.subr.mxu0 0.0
        %535 = vmatpush1.xpose.msra.mxu0 0.0
        %536 = vmatprep.subr.mxu0 0.0
        %537 = vmatpush1.xpose.msra.mxu0 0.0
        %538 = vmatprep.subr.mxu0 0.0
        %539 = vmatpush1.xpose.msra.mxu0 0.0
        %540 = vmatprep.subr.mxu0 0.0
        %541 = vmatpush1.xpose.msra.mxu0 0.0
        %542 = vmatprep.subr.mxu0 0.0
        %543 = vmatpush1.xpose.msra.mxu0 0.0
        %544 = vmatprep.subr.mxu0 0.0
        %545 = vmatpush1.xpose.msra.mxu0 0.0
        %546 = vmatprep.subr.mxu0 0.0
        %547 = vmatpush1.xpose.msra.mxu0 0.0
        %548 = vmatprep.subr.mxu0 0.0
        %549 = vmatpush1.xpose.msra.mxu0 0.0
        %550 = vmatprep.subr.mxu0 0.0
        %551 = vmatpush1.xpose.msra.mxu0 0.0
        %552 = vmatprep.subr.mxu0 0.0
        %553 = vmatpush1.xpose.msra.mxu0 0.0
        %554 = vmatprep.subr.mxu0 0.0
        %555 = vmatpush1.xpose.msra.mxu0 0.0
        %556 = vmatprep.subr.mxu0 0.0
        %557 = vmatpush1.xpose.msra.mxu0 0.0
        %558 = vmatprep.subr.mxu0 0.0
        %559 = vmatpush1.xpose.msra.mxu0 0.0
        %560 = vmatprep.subr.mxu0 0.0
        %561 = vmatpush1.xpose.msra.mxu0 0.0
        %562 = vmatprep.subr.mxu0 0.0
        %563 = vmatpush1.xpose.msra.mxu0 0.0
        %564 = vmatprep.subr.mxu0 0.0
        %565 = vmatpush1.xpose.msra.mxu0 %v532
        %566 = vmatprep.subr.mxu0 0.0
        %567 = vmatpush2.xpose.msra.mxu0 0.0
        %568 = vmatprep.subr.mxu0 0.0
        %569 = vmatpush2.xpose.msra.mxu0 0.0
        %570 = vmatprep.subr.mxu0 0.0
        %571 = vmatpush2.xpose.msra.mxu0 0.0
        %572 = vmatprep.subr.mxu0 0.0
        %573 = vmatpush2.xpose.msra.mxu0 0.0
        %574 = vmatprep.subr.mxu0 0.0
        %575 = vmatpush2.xpose.msra.mxu0 0.0
        %576 = vmatprep.subr.mxu0 0.0
        %577 = vmatpush2.xpose.msra.mxu0 0.0
        %578 = vmatprep.subr.mxu0 0.0
        %579 = vmatpush2.xpose.msra.mxu0 0.0
        %580 = vmatprep.subr.mxu0 0.0
        %581 = vmatpush2.xpose.msra.mxu0 0.0
        %582 = vmatprep.subr.mxu0 0.0
        %583 = vmatpush2.xpose.msra.mxu0 0.0
        %584 = vmatprep.subr.mxu0 0.0
        %585 = vmatpush2.xpose.msra.mxu0 0.0
        %586 = vmatprep.subr.mxu0 0.0
        %587 = vmatpush2.xpose.msra.mxu0 0.0
        %588 = vmatprep.subr.mxu0 0.0
        %589 = vmatpush2.xpose.msra.mxu0 0.0
        %590 = vmatprep.subr.mxu0 0.0
        %591 = vmatpush2.xpose.msra.mxu0 0.0
        %592 = vmatprep.subr.mxu0 0.0
        %593 = vmatpush2.xpose.msra.mxu0 0.0
        %594 = vmatprep.subr.mxu0 0.0
        %595 = vmatpush2.xpose.msra.mxu0 0.0
        %596 = vmatprep.subr.mxu0 0.0
        %597 = vmatpush2.xpose.msra.mxu0 0.0
        %598 = vmatprep.mubr.f32.mxu0 0.0
        %599 = vmatmul.mubr.f32.gmra.mxu0 %v529
        %v600 = vpop.f32.mrf.mxu0
        %v601 = vadd.f32 0.0, %v600
        %v602 = vpop.f32.mrf.mxu0
        %603 = vdwg.mxu0
        %v604 = vmul.f32 %v601, 0.125
        %v605 = vlaneseq
        %v606 = vshrl.u32 %v605, 7
        %v607 = vlaneseq
        %v608 = vand.u32 %v607, 127
        %v609 = vstv %s358
        %vm610 = vcmp.lt.s32.totalorder %v606, %v609
        %vm611 = vcmp.lt.s32.totalorder %v608, %v609
        %vm612 = vmand %vm610, %vm611
        %v613 = vsel %vm612, %v604, 0.0
        %vm614 = vcmask 64512
        %615 = vst.msk [vmem:[%s353] sm:$0xff] %vm614, %v613
        %v616 = vsel %vm611, %v604, -1e+30
        %v617 = vsel %vm614, %v616, -inf
        %618 = vmax.xlane.f32.xlu0 %v617
        %v619 = vpop.xlane.xlu0 %618
        %v620 = vsub.f32 %v616, %v619
        %v621 = vmul.f32 %v620, 1.442695
        %v622 = vpow.pop %v621
        %v623 = vsel %vm614, %v622, 0.0
        %624 = vadd.xlane.f32.xlu0 %v623
        %v625 = vpop.xlane.xlu0 %624
        %v626 = vrcp.pop %v625
        %v627 = vmul.f32 %v622, %v626
        %v629 = vsel %vm614, %v627, 0
        %631 = vmatprep.subr.mxu0 0.0
        %632 = vmatpush1.msra.mxu0 0.0
        %633 = vmatprep.subr.mxu0 0.0
        %634 = vmatpush1.msra.mxu0 0.0
        %635 = vmatprep.subr.mxu0 0.0
        %636 = vmatpush1.msra.mxu0 0.0
        %637 = vmatprep.subr.mxu0 0.0
        %638 = vmatpush1.msra.mxu0 0.0
        %639 = vmatprep.subr.mxu0 0.0
        %640 = vmatpush1.msra.mxu0 0.0
        %641 = vmatprep.subr.mxu0 0.0
        %642 = vmatpush1.msra.mxu0 0.0
        %643 = vmatprep.subr.mxu0 0.0
        %644 = vmatpush1.msra.mxu0 0.0
        %645 = vmatprep.subr.mxu0 0.0
        %646 = vmatpush1.msra.mxu0 0.0
        %647 = vmatprep.subr.mxu0 0.0
        %648 = vmatpush1.msra.mxu0 0.0
        %649 = vmatprep.subr.mxu0 0.0
        %650 = vmatpush1.msra.mxu0 0.0
        %651 = vmatprep.subr.mxu0 0.0
        %652 = vmatpush1.msra.mxu0 0.0
        %653 = vmatprep.subr.mxu0 0.0
        %654 = vmatpush1.msra.mxu0 0.0
        %655 = vmatprep.subr.mxu0 0.0
        %656 = vmatpush1.msra.mxu0 0.0
        %657 = vmatprep.subr.mxu0 0.0
        %658 = vmatpush1.msra.mxu0 0.0
        %659 = vmatprep.subr.mxu0 0.0
        %660 = vmatpush1.msra.mxu0 0.0
        %661 = vmatprep.subr.mxu0 0.0
        %662 = vmatpush1.msra.mxu0 %v359
        %663 = vmatprep.subr.mxu0 0.0
        %664 = vmatpush2.msra.mxu0 0.0
        %665 = vmatprep.subr.mxu0 0.0
        %666 = vmatpush2.msra.mxu0 0.0
        %667 = vmatprep.subr.mxu0 0.0
        %668 = vmatpush2.msra.mxu0 0.0
        %669 = vmatprep.subr.mxu0 0.0
        %670 = vmatpush2.msra.mxu0 0.0
        %671 = vmatprep.subr.mxu0 0.0
        %672 = vmatpush2.msra.mxu0 0.0
        %673 = vmatprep.subr.mxu0 0.0
        %674 = vmatpush2.msra.mxu0 0.0
        %675 = vmatprep.subr.mxu0 0.0
        %676 = vmatpush2.msra.mxu0 0.0
        %677 = vmatprep.subr.mxu0 0.0
        %678 = vmatpush2.msra.mxu0 0.0
        %679 = vmatprep.subr.mxu0 0.0
        %680 = vmatpush2.msra.mxu0 0.0
        %681 = vmatprep.subr.mxu0 0.0
        %682 = vmatpush2.msra.mxu0 0.0
        %683 = vmatprep.subr.mxu0 0.0
        %684 = vmatpush2.msra.mxu0 0.0
        %685 = vmatprep.subr.mxu0 0.0
        %686 = vmatpush2.msra.mxu0 0.0
        %687 = vmatprep.subr.mxu0 0.0
        %688 = vmatpush2.msra.mxu0 0.0
        %689 = vmatprep.subr.mxu0 0.0
        %690 = vmatpush2.msra.mxu0 0.0
        %691 = vmatprep.subr.mxu0 0.0
        %692 = vmatpush2.msra.mxu0 0.0
        %693 = vmatprep.subr.mxu0 0.0
        %694 = vmatpush2.msra.mxu0 0.0
        %695 = vmatprep.mubr.f32.mxu0 0.0
        %696 = vmatmul.mubr.f32.gmra.mxu0 %v629
        %v697 = vpop.f32.mrf.mxu0
        %v698 = vadd.f32 0.0, %v697
        %v699 = vpop.f32.mrf.mxu0
        %700 = vdwg.mxu0
        %701 = vst.msk [vmem:[%s339] sm:$0xff] %vm376, %v698
        %v702 = vld [vmem:[%s5] sm:$0x1]
        %v704 = vlaneseq
        %v705 = vshrl.u32 %v704, 7
        %v706 = vsub.s32 0, %v705
        %v707 = vrot.slane %v702, %v706
        %v709 = vmul.f32 %v359, %v707
        %v710 = vsel %vm376, %v709, 0.0
        %711 = vadd.xlane.f32.xlu0 %v710
        %v712 = vpop.xlane.xlu0 %711
        %v713 = vld [vmem:[%s6] sm:$0x1]
        %v715 = vlaneseq
        %v716 = vshrl.u32 %v715, 7
        %v717 = vsub.s32 0, %v716
        %v718 = vrot.slane %v713, %v717
        %v720 = vmul.f32 %v698, %v718
        %v721 = vsel %vm376, %v720, 0.0
        %722 = vadd.xlane.f32.xlu0 %v721
        %v723 = vpop.xlane.xlu0 %722
        %v724 = vadd.f32 %v712, %v723
        %v725 = vld [vmem:[#allocation4] sm:$0x1]
        %v727 = vlaneseq
        %v728 = vshrl.u32 %v727, 7
        %v729 = vsub.s32 0, %v728
        %v730 = vrot.slane %v725, %v729
        %v732 = vadd.f32 %v724, %v730
        %vm733 = vcmask 7168
        %734 = vst.msk [vmem:[%s357] sm:$0xff] %vm733, %v732
        %p735 = scmp.lt.s32.totalorder %s33, 1
        %s736 = scalar_select %p735, %s33, 1
        %s737 = smul.addr %s736, 8
        %s738 = scalar_lea.vmem %s8, %s737
        %s739 = sand.u32 %s219, 1
        %s740 = scalar_lea.sflag [#allocation6], %s739
        %s741 = sand.u32 %s219, 1
        %s742 = smul.addr %s741, 8
        %s743 = scalar_lea.vmem [#allocation5], %s742
        %p744 = scmp.lt.s32.totalorder %s33, 1
        %s745 = scalar_select %p744, %s33, 1
        %s746 = smul.addr %s745, 8
        %s747 = scalar_lea.vmem %s10, %s746
        // Predicated region
        $region49: #{_device_core.5} parent=47 // pred_check
          %p748 = pneg %p203
        $region50: #{_device_core.5} parent=47 // pred_check_branch
          %750 = sbr.rel (%p748) target = $region52
        $region51: #{_device_core.5} parent=47 // pred_region
          _
        $region52: #{_device_core.5} parent=47 // pred_fallthru
          _
        // Predicated region
        $region53: #{_device_core.5} parent=47 // pred_check
          %p751 = pneg %p229
        $region54: #{_device_core.5} parent=47 // pred_check_branch
          %753 = sbr.rel (%p751) target = $region56
        $region55: #{_device_core.5} parent=47 // pred_region
          %s755 = ssub.s32 128, 128
          %756 = vsyncadd %s740, %s755
          %s757 = smul.addr %s33, 128
          %s758 = scalar_lea.hbm %s9, %s757
          %s760 = sshll.u32 %s743, 4
          %s761 = int_to_ptr.vmem [resolvable:$true] %s760
          %763 = dma.vmem_to_hbm [thread:$0]  %s761, 128, %s758, %s740
        $region56: #{_device_core.5} parent=47 // pred_fallthru
          _
        // Predicated region
        $region57: #{_device_core.5} parent=47 // pred_check
          %p764 = pneg %p255
        $region58: #{_device_core.5} parent=47 // pred_check_branch
          %766 = sbr.rel (%p764) target = $region60
        $region59: #{_device_core.5} parent=47 // pred_region
          _
        $region60: #{_device_core.5} parent=47 // pred_fallthru
          _
      $region48: #{_device_core.5} parent=5 // pred_fallthru
        _
      %p767 = scmp.le.s32.totalorder 2, %s28
      // Predicated region
      $region61: #{_device_core.5} parent=5 // pred_check
        %p768 = pneg %p767
      $region62: #{_device_core.5} parent=5 // pred_check_branch
        %770 = sbr.rel (%p768) target = $region64
      $region63: #{_device_core.5} parent=5 // pred_region
        %s771 = ssub.s32 %s28, 2
        // Predicated region
        $region65: #{_device_core.5} parent=63 // pred_check
          %p772 = pneg %p209
        $region66: #{_device_core.5} parent=63 // pred_check_branch
          %774 = sbr.rel (%p772) target = $region68
        $region67: #{_device_core.5} parent=63 // pred_region
          %p775 = scmp.lt.s32.totalorder %s34, 1
          %s776 = scalar_select %p775, %s34, 1
          %s777 = smul.addr %s776, 8
          %s778 = scalar_lea.vmem %s8, %s777
        $region68: #{_device_core.5} parent=63 // pred_fallthru
          _
        // Predicated region
        $region69: #{_device_core.5} parent=63 // pred_check
          %p779 = pneg %p235
        $region70: #{_device_core.5} parent=63 // pred_check_branch
          %781 = sbr.rel (%p779) target = $region72
        $region71: #{_device_core.5} parent=63 // pred_region
          %s782 = sand.u32 %s220, 1
          %s783 = scalar_lea.sflag [#allocation6], %s782
          %s784 = sand.u32 %s220, 1
          %s785 = smul.addr %s784, 8
          %s786 = scalar_lea.vmem [#allocation5], %s785
          %787 = dma.done %s783, 128
        $region72: #{_device_core.5} parent=63 // pred_fallthru
          _
        // Predicated region
        $region73: #{_device_core.5} parent=63 // pred_check
          %p788 = pneg %p261
        $region74: #{_device_core.5} parent=63 // pred_check_branch
          %790 = sbr.rel (%p788) target = $region76
        $region75: #{_device_core.5} parent=63 // pred_region
          %p791 = scmp.lt.s32.totalorder %s34, 1
          %s792 = scalar_select %p791, %s34, 1
          %s793 = smul.addr %s792, 8
          %s794 = scalar_lea.vmem %s10, %s793
        $region76: #{_device_core.5} parent=63 // pred_fallthru
          _
      $region64: #{_device_core.5} parent=5 // pred_fallthru
        _
    $region6: #{_device_core.5} parent=1 // loop_footer
      %s32 = sadd.s32 1, %s28
    $region7: #{_device_core.5} parent=1 // loop_footer_branch
      %27 = sbr.rel target = $region3
    $region8: #{_device_core.5} parent=1 // loop_exit
      _
    %795 = vsyncpa [#allocation6], 1
    %s796 = scalar_lea.sflag [#allocation6], 1
    %797 = vsyncpa %s796, 1

</llo_original>
